<compile_context>
chip_gen: v6e
topology: v6e:2x2x1
jax: 0.10.0
libtpu: 0.0.40
codegen_flags: <defaults>
</compile_context>

<pallas_src>
import functools
import math

import jax
import jax.numpy as jnp
from jax.experimental import pallas as pl
from jax.experimental.pallas import tpu as pltpu


def _round_up(x, m):
    return ((x + m - 1) // m) * m


def _gaussian_smearing_kernel(dist_ref, mean_ref, inv_std_ref, coeff_ref,
                              out_ref, *, pack, num_basis):
    # dist_ref: (tile_r, pack); mean/inv_std/coeff: (1, pack*num_basis);
    # out_ref: (tile_r, pack*num_basis) -- lane-dense (last dim multiple of 128).
    tile_r, width = out_ref.shape
    d = dist_ref[...]
    if pack == 1:
        wide = d  # (tile_r, 1); broadcasts against (1, width) params below.
    else:
        # Spread column p of d across lanes [p*B, (p+1)*B): cheap VPU select chain,
        # keeps the exp/store path operating on fully dense vregs.
        lane = jax.lax.broadcasted_iota(jnp.int32, (tile_r, width), 1)
        wide = jnp.broadcast_to(d[:, pack - 1:pack], (tile_r, width))
        for p in range(pack - 2, -1, -1):
            col = jnp.broadcast_to(d[:, p:p + 1], (tile_r, width))
            wide = jnp.where(lane < (p + 1) * num_basis, col, wide)
    z = (wide - mean_ref[...]) * inv_std_ref[...]
    out_ref[...] = coeff_ref[...] * jnp.exp(-0.5 * (z * z))


def gaussian_smearing(dist, mean, std, *, eps=1e-8, tile_n=2048):
    """dist: (N, 1) or (N,) f32; mean/std: (1, B) f32 -> (N, B) f32."""
    N = dist.shape[0]
    B = mean.shape[-1]
    dist = dist.reshape(N).astype(jnp.float32)
    mean = mean.reshape(1, B).astype(jnp.float32)
    std = std.reshape(1, B).astype(jnp.float32)

    # Fold factor: how many distances share one lane-row (lane-dense output).
    pack = 128 // B if (B < 128 and 128 % B == 0) else 1
    width = pack * B

    # Hoisted parameter prep (exact f32 reciprocal; no divide in the kernel).
    std_eff = jnp.abs(std) + eps
    inv_std = 1.0 / std_eff
    coeff = inv_std * (1.0 / math.sqrt(2.0 * math.pi))
    mean_t = jnp.tile(mean, (1, pack))
    inv_std_t = jnp.tile(inv_std, (1, pack))
    coeff_t = jnp.tile(coeff, (1, pack))

    # Tiling over folded rows (tile_n distances per grid step).
    n_fold = pl.cdiv(N, pack)
    tile_r = max(8, _round_up(tile_n // pack, 8))
    tile_r = min(tile_r, _round_up(n_fold, 8))
    n_fold_pad = _round_up(n_fold, tile_r)
    n_pad = n_fold_pad * pack

    dist_p = jnp.pad(dist, (0, n_pad - N)) if n_pad != N else dist
    dist_fold = dist_p.reshape(n_fold_pad, pack)  # free row-major reshape

    kernel = functools.partial(_gaussian_smearing_kernel, pack=pack, num_basis=B)

    out_fold = pl.pallas_call(
        kernel,
        out_shape=jax.ShapeDtypeStruct((n_fold_pad, width), jnp.float32),
        grid_spec=pltpu.PrefetchScalarGridSpec(
            num_scalar_prefetch=0,
            grid=(n_fold_pad // tile_r,),
            in_specs=[
                pl.BlockSpec((tile_r, pack), lambda i: (i, 0)),   # folded distances
                pl.BlockSpec((1, width), lambda i: (0, 0)),       # mean   (VMEM-resident)
                pl.BlockSpec((1, width), lambda i: (0, 0)),       # 1/std  (VMEM-resident)
                pl.BlockSpec((1, width), lambda i: (0, 0)),       # coeff  (VMEM-resident)
            ],
            out_specs=pl.BlockSpec((tile_r, width), lambda i: (i, 0)),
        ),
        compiler_params=pltpu.CompilerParams(
            dimension_semantics=("parallel",)),
    )(dist_fold, mean_t, inv_std_t, coeff_t)

    # Free row-major unfold back to (N, B).
    return out_fold.reshape(n_pad, B)[:N]


def gaussian_smearing_ref(dist, mean, std, eps=1e-8):
    std = jnp.abs(std) + eps
    coeff = 1.0 / (std * math.sqrt(2.0 * math.pi))
    return coeff * jnp.exp(-0.5 * ((dist - mean) / std) ** 2)


if __name__ == "__main__":
    num_basis = 32
    cutoff = 5.0
    eps = 1e-8
    N = 4096          # number of distances (2 grid steps at tile_n=2048)
    tile_n = 2048

    key = jax.random.PRNGKey(0)
    k_mean, k_std, k_dist = jax.random.split(key, 3)

    # Deterministic parameter init matching the PyTorch __init__ distributions:
    #   mean ~ U(0, cutoff), std ~ U(1/num_basis, 1)
    mean = jax.random.uniform(k_mean, (1, num_basis), jnp.float32, 0.0, cutoff)
    std = jax.random.uniform(
        k_std, (1, num_basis), jnp.float32, 1.0 / num_basis, 1.0
    )

    # Example input distances in [0, cutoff), shape (N, 1) as in the module forward.
    dist = jax.random.uniform(k_dist, (N, 1), jnp.float32, 0.0, cutoff)

    out = gaussian_smearing(dist, mean, std, eps=eps, tile_n=tile_n)
    out = jax.block_until_ready(out)

    ref = gaussian_smearing_ref(dist, mean, std, eps=eps)
    assert out.shape == (N, num_basis)
    assert jnp.allclose(out, ref, atol=1e-5, rtol=1e-5)

    print("KERNEL_OK")
</pallas_src>

<mosaic_0001>
module attributes {stable_mosaic.version = 11 : i64} {
  func.func @_gaussian_smearing_kernel(%arg0: i32, %arg1: memref<512x4xf32, #tpu.memory_space<vmem>>, %arg2: memref<1x128xf32, #tpu.memory_space<vmem>>, %arg3: memref<1x128xf32, #tpu.memory_space<vmem>>, %arg4: memref<1x128xf32, #tpu.memory_space<vmem>>, %arg5: memref<512x128xf32, #tpu.memory_space<vmem>>) attributes {dimension_semantics = [#tpu.dimension_semantics<parallel>], iteration_bounds = array<i64: 2>, scalar_prefetch = 0 : i64, scratch_operands = 0 : i64, tpu.core_type = #tpu.core_type<tc>, window_params = [{transform_indices = @transform_0, window_bounds = array<i64: 512, 4>}, {pipeline_mode = #tpu.pipeline_mode<synchronous>, transform_indices = @transform_1, window_bounds = array<i64: 1, 128>}, {pipeline_mode = #tpu.pipeline_mode<synchronous>, transform_indices = @transform_2, window_bounds = array<i64: 1, 128>}, {pipeline_mode = #tpu.pipeline_mode<synchronous>, transform_indices = @transform_3, window_bounds = array<i64: 1, 128>}, {transform_indices = @transform_4, window_bounds = array<i64: 512, 128>}]} {
    %c0 = arith.constant 0 : index
    %c0_0 = arith.constant 0 : index
    %0 = vector.load %arg1[%c0, %c0_0] : memref<512x4xf32, #tpu.memory_space<vmem>>, vector<512x4xf32>
    %1 = tpu.iota {dimensions = array<i32: 1>} : vector<512x128xi32>
    %2 = vector.extract_strided_slice %0 {offsets = [0, 3], sizes = [512, 1], strides = [1, 1]} : vector<512x4xf32> to vector<512x1xf32>
    %3 = vector.shape_cast %2 : vector<512x1xf32> to vector<512x1xf32>
    %4 = vector.broadcast %3 : vector<512x1xf32> to vector<512x128xf32>
    %5 = vector.extract_strided_slice %0 {offsets = [0, 2], sizes = [512, 1], strides = [1, 1]} : vector<512x4xf32> to vector<512x1xf32>
    %6 = vector.shape_cast %5 : vector<512x1xf32> to vector<512x1xf32>
    %7 = vector.broadcast %6 : vector<512x1xf32> to vector<512x128xf32>
    %c96_i32 = arith.constant 96 : i32
    %8 = vector.broadcast %c96_i32 : i32 to vector<512x128xi32>
    %9 = arith.cmpi slt, %1, %8 : vector<512x128xi32>
    %10 = arith.select %9, %7, %4 : vector<512x128xi1>, vector<512x128xf32>
    %11 = vector.extract_strided_slice %0 {offsets = [0, 1], sizes = [512, 1], strides = [1, 1]} : vector<512x4xf32> to vector<512x1xf32>
    %12 = vector.shape_cast %11 : vector<512x1xf32> to vector<512x1xf32>
    %13 = vector.broadcast %12 : vector<512x1xf32> to vector<512x128xf32>
    %c64_i32 = arith.constant 64 : i32
    %14 = vector.broadcast %c64_i32 : i32 to vector<512x128xi32>
    %15 = arith.cmpi slt, %1, %14 : vector<512x128xi32>
    %16 = arith.select %15, %13, %10 : vector<512x128xi1>, vector<512x128xf32>
    %17 = vector.extract_strided_slice %0 {offsets = [0, 0], sizes = [512, 1], strides = [1, 1]} : vector<512x4xf32> to vector<512x1xf32>
    %18 = vector.shape_cast %17 : vector<512x1xf32> to vector<512x1xf32>
    %19 = vector.broadcast %18 : vector<512x1xf32> to vector<512x128xf32>
    %c32_i32 = arith.constant 32 : i32
    %20 = vector.broadcast %c32_i32 : i32 to vector<512x128xi32>
    %21 = arith.cmpi slt, %1, %20 : vector<512x128xi32>
    %22 = arith.select %21, %19, %16 : vector<512x128xi1>, vector<512x128xf32>
    %c0_1 = arith.constant 0 : index
    %c0_2 = arith.constant 0 : index
    %23 = vector.load %arg2[%c0_1, %c0_2] : memref<1x128xf32, #tpu.memory_space<vmem>>, vector<1x128xf32>
    %24 = vector.broadcast %23 : vector<1x128xf32> to vector<512x128xf32>
    %25 = arith.subf %22, %24 : vector<512x128xf32>
    %c0_3 = arith.constant 0 : index
    %c0_4 = arith.constant 0 : index
    %26 = vector.load %arg3[%c0_3, %c0_4] : memref<1x128xf32, #tpu.memory_space<vmem>>, vector<1x128xf32>
    %27 = vector.broadcast %26 : vector<1x128xf32> to vector<512x128xf32>
    %28 = arith.mulf %25, %27 : vector<512x128xf32>
    %c0_5 = arith.constant 0 : index
    %c0_6 = arith.constant 0 : index
    %29 = vector.load %arg4[%c0_5, %c0_6] : memref<1x128xf32, #tpu.memory_space<vmem>>, vector<1x128xf32>
    %30 = arith.mulf %28, %28 : vector<512x128xf32>
    %cst = arith.constant -5.000000e-01 : f32
    %31 = vector.broadcast %cst : f32 to vector<512x128xf32>
    %32 = arith.mulf %31, %30 : vector<512x128xf32>
    %33 = math.exp %32 : vector<512x128xf32>
    %34 = vector.broadcast %29 : vector<1x128xf32> to vector<512x128xf32>
    %35 = arith.mulf %34, %33 : vector<512x128xf32>
    %c0_7 = arith.constant 0 : index
    %c0_8 = arith.constant 0 : index
    %36 = vector.load %arg5[%c0_7, %c0_8] : memref<512x128xf32, #tpu.memory_space<vmem>>, vector<512x128xf32>
    tpu.vector_store %arg5[%c0_7, %c0_8], %35 {strides = array<i32>} : memref<512x128xf32, #tpu.memory_space<vmem>>, vector<512x128xf32>,
    return
  }
  func.func @transform_0(%arg0: i32) -> (i32, i32) {
    %c0_i32 = arith.constant 0 : i32
    %c0_i32_0 = arith.constant 0 : i32
    return %arg0, %c0_i32 : i32, i32
  }
  func.func @transform_1(%arg0: i32) -> (i32, i32) {
    %c0_i32 = arith.constant 0 : i32
    %c0_i32_0 = arith.constant 0 : i32
    %c0_i32_1 = arith.constant 0 : i32
    return %c0_i32, %c0_i32_0 : i32, i32
  }
  func.func @transform_2(%arg0: i32) -> (i32, i32) {
    %c0_i32 = arith.constant 0 : i32
    %c0_i32_0 = arith.constant 0 : i32
    %c0_i32_1 = arith.constant 0 : i32
    return %c0_i32, %c0_i32_0 : i32, i32
  }
  func.func @transform_3(%arg0: i32) -> (i32, i32) {
    %c0_i32 = arith.constant 0 : i32
    %c0_i32_0 = arith.constant 0 : i32
    %c0_i32_1 = arith.constant 0 : i32
    return %c0_i32, %c0_i32_0 : i32, i32
  }
  func.func @transform_4(%arg0: i32) -> (i32, i32) {
    %c0_i32 = arith.constant 0 : i32
    %c0_i32_0 = arith.constant 0 : i32
    return %arg0, %c0_i32 : i32, i32
  }
}

</mosaic_0001>

<llo_original>
// kernel: tpu_custom_call.1
$region0: #{tpu_custom_call.1}
  #allocation0 [shape = 'u32[]', space=smem, size = 0x4, offset = 0x4, fixed_abs, tag = 'smem constant byte address 0x4 - core index']
  #allocation1 [shape = 'u32[144,128]{1,0:T(1,128)}', space=vmem, size = 0x12000, scoped, tag = 'internal scratch']
  %s0 = inlined_call_operand.vmem [shape: f32[1024,4], index: 0, kind: input, shape index: {}]
  %s1 = inlined_call_operand.vmem [shape: f32[1,128], index: 1, kind: input, shape index: {}]
  %s2 = inlined_call_operand.vmem [shape: f32[1,128], index: 2, kind: input, shape index: {}]
  %s3 = inlined_call_operand.vmem [shape: f32[1,128], index: 3, kind: input, shape index: {}]
  %s4 = inlined_call_operand.hbm [shape: f32[1024,128], index: 4, kind: output, shape index: {}]
  %s5 = sld [smem:[#allocation0]]
  $region49: #{tpu_custom_call.1} parent=0
    _
  %s7 = ssub.s32 1, %s5
  %s8 = scalar_select 0, %s7, %s5
  $region1: #{tpu_custom_call.1} parent=0
    #allocation2 [shape = 'u8[524288]{0}', space=vmem, size = 0x80000, scoped, tag = 'output window, operand 0']
    #allocation3 [shape = 's32[2]{0}', space=sflag, size = 0x8, scoped, tag = 'scoped memory for tpu_custom_call.1']
    %9 = vsyncpa [#allocation3], 0
    %s10 = scalar_lea.sflag [#allocation3], 1
    %11 = vsyncpa %s10, 0
    loop: start=0, step=1, limit=4
    $region2: #{tpu_custom_call.1} parent=1 // loop_pre_header
      _
    $region3: #{tpu_custom_call.1} parent=1 // loop_header
      %s13 = sphi 0, %s17
      %p14 = scmp.ge.s32.totalorder %s13, 4
      %s23 = sphi 0, %s25
      %s26 = sphi 0, %s23
      %s27 = sphi 0, %s26
      %s43 = sphi 0, %s27
      %s47 = sphi 0, %s47
      %s49 = sphi 0, %s47
      %s50 = sphi 0, %s49
      %s64 = sphi 0, %s50
      %s68 = sphi 0, %s68
      %s70 = sphi 0, %s68
      %s71 = sphi 0, %s70
      %s85 = sphi 0, %s71
      %s89 = sphi 0, %s89
      %s91 = sphi 0, %s89
      %s92 = sphi 0, %s91
      %s106 = sphi 0, %s92
      %s112 = sphi 0, %s114
      %s115 = sphi 0, %s112
      %s116 = sphi 0, %s115
      %s132 = sphi 0, %s116
    $region4: #{tpu_custom_call.1} parent=1 // loop_header_branch
      %16 = sbr.rel (%p14) target = $region8
    $region5: #{tpu_custom_call.1} parent=1 // loop_body
      %s18 = ssub.s32 %s13, 1
      %s19 = ssub.s32 %s13, 2
      %s20 = sadd.s32 %s13, 1
      %s21 = ssub.s32 %s13, %s20
      %p22 = scmp.eq.s32.totalorder %s21, 0
      %s24 = sadd.s32 %s23, 1
      %s25 = scalar_select %p22, %s23, %s24
      %p28 = pneg %p22
      %p29 = scmp.eq.s32.totalorder %s13, 1
      %p30 = por %p28, %p29
      %p31 = scmp.ne.s32.totalorder %s23, %s26
      %p32 = scmp.eq.s32.totalorder %s13, 0
      %p33 = por %p31, %p32
      %p34 = scmp.ne.s32.totalorder %s23, %s26
      %p35 = scmp.eq.s32.totalorder %s18, 1
      %p36 = por %p34, %p35
      %p37 = scmp.ne.s32.totalorder %s26, %s27
      %p38 = scmp.eq.s32.totalorder %s18, 0
      %p39 = por %p37, %p38
      %p40 = scmp.ne.s32.totalorder %s26, %s27
      %p41 = scmp.eq.s32.totalorder %s19, 1
      %p42 = por %p40, %p41
      %p44 = scmp.ne.s32.totalorder %s27, %s43
      %p45 = scmp.eq.s32.totalorder %s19, 0
      %p46 = por %p44, %p45
      %s48 = sadd.s32 %s47, 1
      %p51 = scmp.eq.s32.totalorder %s13, 1
      %p52 = scmp.ne.s32.totalorder %s47, %s49
      %p53 = scmp.eq.s32.totalorder %s13, 0
      %p54 = por %p52, %p53
      %p55 = scmp.ne.s32.totalorder %s47, %s49
      %p56 = scmp.eq.s32.totalorder %s18, 1
      %p57 = por %p55, %p56
      %p58 = scmp.ne.s32.totalorder %s49, %s50
      %p59 = scmp.eq.s32.totalorder %s18, 0
      %p60 = por %p58, %p59
      %p61 = scmp.ne.s32.totalorder %s49, %s50
      %p62 = scmp.eq.s32.totalorder %s19, 1
      %p63 = por %p61, %p62
      %p65 = scmp.ne.s32.totalorder %s50, %s64
      %p66 = scmp.eq.s32.totalorder %s19, 0
      %p67 = por %p65, %p66
      %s69 = sadd.s32 %s68, 1
      %p72 = scmp.eq.s32.totalorder %s13, 1
      %p73 = scmp.ne.s32.totalorder %s68, %s70
      %p74 = scmp.eq.s32.totalorder %s13, 0
      %p75 = por %p73, %p74
      %p76 = scmp.ne.s32.totalorder %s68, %s70
      %p77 = scmp.eq.s32.totalorder %s18, 1
      %p78 = por %p76, %p77
      %p79 = scmp.ne.s32.totalorder %s70, %s71
      %p80 = scmp.eq.s32.totalorder %s18, 0
      %p81 = por %p79, %p80
      %p82 = scmp.ne.s32.totalorder %s70, %s71
      %p83 = scmp.eq.s32.totalorder %s19, 1
      %p84 = por %p82, %p83
      %p86 = scmp.ne.s32.totalorder %s71, %s85
      %p87 = scmp.eq.s32.totalorder %s19, 0
      %p88 = por %p86, %p87
      %s90 = sadd.s32 %s89, 1
      %p93 = scmp.eq.s32.totalorder %s13, 1
      %p94 = scmp.ne.s32.totalorder %s89, %s91
      %p95 = scmp.eq.s32.totalorder %s13, 0
      %p96 = por %p94, %p95
      %p97 = scmp.ne.s32.totalorder %s89, %s91
      %p98 = scmp.eq.s32.totalorder %s18, 1
      %p99 = por %p97, %p98
      %p100 = scmp.ne.s32.totalorder %s91, %s92
      %p101 = scmp.eq.s32.totalorder %s18, 0
      %p102 = por %p100, %p101
      %p103 = scmp.ne.s32.totalorder %s91, %s92
      %p104 = scmp.eq.s32.totalorder %s19, 1
      %p105 = por %p103, %p104
      %p107 = scmp.ne.s32.totalorder %s92, %s106
      %p108 = scmp.eq.s32.totalorder %s19, 0
      %p109 = por %p107, %p108
      %s110 = ssub.s32 %s13, %s20
      %p111 = scmp.eq.s32.totalorder %s110, 0
      %s113 = sadd.s32 %s112, 1
      %s114 = scalar_select %p111, %s112, %s113
      %p117 = pneg %p111
      %p118 = scmp.eq.s32.totalorder %s13, 1
      %p119 = por %p117, %p118
      %p120 = scmp.ne.s32.totalorder %s112, %s115
      %p121 = scmp.eq.s32.totalorder %s13, 0
      %p122 = por %p120, %p121
      %p123 = scmp.ne.s32.totalorder %s112, %s115
      %p124 = scmp.eq.s32.totalorder %s18, 1
      %p125 = por %p123, %p124
      %p126 = scmp.ne.s32.totalorder %s115, %s116
      %p127 = scmp.eq.s32.totalorder %s18, 0
      %p128 = por %p126, %p127
      %p129 = scmp.ne.s32.totalorder %s115, %s116
      %p130 = scmp.eq.s32.totalorder %s19, 1
      %p131 = por %p129, %p130
      %p133 = scmp.ne.s32.totalorder %s116, %s132
      %p134 = scmp.eq.s32.totalorder %s19, 0
      %p135 = por %p133, %p134
      %p136 = scmp.le.s32.totalorder 1, %s13
      %p137 = scmp.lt.s32.totalorder %s13, 3
      %p138 = pnand %p136, %p137
      %p139 = pneg %p138
      // Predicated region
      $region9: #{tpu_custom_call.1} parent=5 // pred_check
        _
      $region10: #{tpu_custom_call.1} parent=5 // pred_check_branch
        %141 = sbr.rel (%p138) target = $region12
      $region11: #{tpu_custom_call.1} parent=5 // pred_region
        %s142 = ssub.s32 %s13, 1
        // Predicated region
        $region13: #{tpu_custom_call.1} parent=11 // pred_check
          %p143 = pneg %p60
        $region14: #{tpu_custom_call.1} parent=11 // pred_check_branch
          %145 = sbr.rel (%p143) target = $region16
        $region15: #{tpu_custom_call.1} parent=11 // pred_region
          _
        $region16: #{tpu_custom_call.1} parent=11 // pred_fallthru
          _
        // Predicated region
        $region17: #{tpu_custom_call.1} parent=11 // pred_check
          %p146 = pneg %p81
        $region18: #{tpu_custom_call.1} parent=11 // pred_check_branch
          %148 = sbr.rel (%p146) target = $region20
        $region19: #{tpu_custom_call.1} parent=11 // pred_region
          _
        $region20: #{tpu_custom_call.1} parent=11 // pred_fallthru
          _
        // Predicated region
        $region21: #{tpu_custom_call.1} parent=11 // pred_check
          %p149 = pneg %p102
        $region22: #{tpu_custom_call.1} parent=11 // pred_check_branch
          %151 = sbr.rel (%p149) target = $region24
        $region23: #{tpu_custom_call.1} parent=11 // pred_region
          _
        $region24: #{tpu_custom_call.1} parent=11 // pred_fallthru
          _
      $region12: #{tpu_custom_call.1} parent=5 // pred_fallthru
        _
      %p152 = scmp.lt.s32.totalorder %s13, 2
      // Predicated region
      $region25: #{tpu_custom_call.1} parent=5 // pred_check
        %p153 = pneg %p152
      $region26: #{tpu_custom_call.1} parent=5 // pred_check_branch
        %155 = sbr.rel (%p153) target = $region28
      $region27: #{tpu_custom_call.1} parent=5 // pred_region
        // Predicated region
        $region29: #{tpu_custom_call.1} parent=27 // pred_check
          %p156 = pneg %p33
        $region30: #{tpu_custom_call.1} parent=27 // pred_check_branch
          %158 = sbr.rel (%p156) target = $region32
        $region31: #{tpu_custom_call.1} parent=27 // pred_region
          %s159 = smul.u32 64, %s13
          %p160 = scmp.lt.s32.totalorder %s159, 127
          %s161 = scalar_select %p160, %s159, 127
          %s162 = smul.addr %s161, 8
          %s163 = scalar_lea.vmem %s0, %s162
          %s164 = smul.u32 64, %s13
        $region32: #{tpu_custom_call.1} parent=27 // pred_fallthru
          _
      $region28: #{tpu_custom_call.1} parent=5 // pred_fallthru
        _
      %p165 = scmp.le.s32.totalorder 1, %s13
      %p166 = scmp.lt.s32.totalorder %s13, 3
      %p167 = pnand %p165, %p166
      %p168 = pneg %p167
      // Predicated region
      $region33: #{tpu_custom_call.1} parent=5 // pred_check
        _
      $region34: #{tpu_custom_call.1} parent=5 // pred_check_branch
        %170 = sbr.rel (%p167) target = $region36
      $region35: #{tpu_custom_call.1} parent=5 // pred_region
        %s171 = ssub.s32 %s13, 1
        %s172 = smul.u32 64, %s18
        %p173 = scmp.lt.s32.totalorder %s172, 127
        %s174 = scalar_select %p173, %s172, 127
        %s175 = smul.addr %s174, 8
        %s176 = scalar_lea.vmem %s0, %s175
        %p177 = pneg %p39
        %p178 = pneg %p36
        %p179 = pneg %p60
        %p180 = pneg %p57
        %p181 = pneg %p81
        %p182 = pneg %p78
        %p183 = pneg %p102
        %p184 = pneg %p99
        %p185 = pneg %p128
        %p186 = pneg %p125
        %s187 = sand.u32 %s115, 1
        %s188 = scalar_lea.sflag [#allocation3], %s187
        %s189 = sand.u32 %s115, 1
        %s190 = smul.addr %s189, 512
        %s191 = scalar_lea.vmem [#allocation2], %s190
        %s192 = smul.u32 64, %s18
        %p193 = scmp.lt.s32.totalorder %s192, 127
        %s194 = scalar_select %p193, %s192, 127
        %s195 = smul.addr %s194, 8
        %s196 = scalar_lea.vmem %s0, %s195
        %s197 = smul.u32 64, %s18
        %s198 = smul.u32 64, %s18
        %v199 = vld [vmem:[%s196] sm:$0xff]
        %v200 = vld [vmem:[%s196 + $0x8] sm:$0xff]
        %v201 = vld [vmem:[%s196 + $0x10] sm:$0xff]
        %v202 = vld [vmem:[%s196 + $0x18] sm:$0xff]
        %v203 = vld [vmem:[%s196 + $0x20] sm:$0xff]
        %v204 = vld [vmem:[%s196 + $0x28] sm:$0xff]
        %v205 = vld [vmem:[%s196 + $0x30] sm:$0xff]
        %v206 = vld [vmem:[%s196 + $0x38] sm:$0xff]
        %v207 = vld [vmem:[%s196 + $0x40] sm:$0xff]
        %v208 = vld [vmem:[%s196 + $0x48] sm:$0xff]
        %v209 = vld [vmem:[%s196 + $0x50] sm:$0xff]
        %v210 = vld [vmem:[%s196 + $0x58] sm:$0xff]
        %v211 = vld [vmem:[%s196 + $0x60] sm:$0xff]
        %v212 = vld [vmem:[%s196 + $0x68] sm:$0xff]
        %v213 = vld [vmem:[%s196 + $0x70] sm:$0xff]
        %v214 = vld [vmem:[%s196 + $0x78] sm:$0xff]
        %v215 = vld [vmem:[%s196 + $0x80] sm:$0xff]
        %v216 = vld [vmem:[%s196 + $0x88] sm:$0xff]
        %v217 = vld [vmem:[%s196 + $0x90] sm:$0xff]
        %v218 = vld [vmem:[%s196 + $0x98] sm:$0xff]
        %v219 = vld [vmem:[%s196 + $0xa0] sm:$0xff]
        %v220 = vld [vmem:[%s196 + $0xa8] sm:$0xff]
        %v221 = vld [vmem:[%s196 + $0xb0] sm:$0xff]
        %v222 = vld [vmem:[%s196 + $0xb8] sm:$0xff]
        %v223 = vld [vmem:[%s196 + $0xc0] sm:$0xff]
        %v224 = vld [vmem:[%s196 + $0xc8] sm:$0xff]
        %v225 = vld [vmem:[%s196 + $0xd0] sm:$0xff]
        %v226 = vld [vmem:[%s196 + $0xd8] sm:$0xff]
        %v227 = vld [vmem:[%s196 + $0xe0] sm:$0xff]
        %v228 = vld [vmem:[%s196 + $0xe8] sm:$0xff]
        %v229 = vld [vmem:[%s196 + $0xf0] sm:$0xff]
        %v230 = vld [vmem:[%s196 + $0xf8] sm:$0xff]
        %v231 = vld [vmem:[%s196 + $0x100] sm:$0xff]
        %v232 = vld [vmem:[%s196 + $0x108] sm:$0xff]
        %v233 = vld [vmem:[%s196 + $0x110] sm:$0xff]
        %v234 = vld [vmem:[%s196 + $0x118] sm:$0xff]
        %v235 = vld [vmem:[%s196 + $0x120] sm:$0xff]
        %v236 = vld [vmem:[%s196 + $0x128] sm:$0xff]
        %v237 = vld [vmem:[%s196 + $0x130] sm:$0xff]
        %v238 = vld [vmem:[%s196 + $0x138] sm:$0xff]
        %v239 = vld [vmem:[%s196 + $0x140] sm:$0xff]
        %v240 = vld [vmem:[%s196 + $0x148] sm:$0xff]
        %v241 = vld [vmem:[%s196 + $0x150] sm:$0xff]
        %v242 = vld [vmem:[%s196 + $0x158] sm:$0xff]
        %v243 = vld [vmem:[%s196 + $0x160] sm:$0xff]
        %v244 = vld [vmem:[%s196 + $0x168] sm:$0xff]
        %v245 = vld [vmem:[%s196 + $0x170] sm:$0xff]
        %v246 = vld [vmem:[%s196 + $0x178] sm:$0xff]
        %v247 = vld [vmem:[%s196 + $0x180] sm:$0xff]
        %v248 = vld [vmem:[%s196 + $0x188] sm:$0xff]
        %v249 = vld [vmem:[%s196 + $0x190] sm:$0xff]
        %v250 = vld [vmem:[%s196 + $0x198] sm:$0xff]
        %v251 = vld [vmem:[%s196 + $0x1a0] sm:$0xff]
        %v252 = vld [vmem:[%s196 + $0x1a8] sm:$0xff]
        %v253 = vld [vmem:[%s196 + $0x1b0] sm:$0xff]
        %v254 = vld [vmem:[%s196 + $0x1b8] sm:$0xff]
        %v255 = vld [vmem:[%s196 + $0x1c0] sm:$0xff]
        %v256 = vld [vmem:[%s196 + $0x1c8] sm:$0xff]
        %v257 = vld [vmem:[%s196 + $0x1d0] sm:$0xff]
        %v258 = vld [vmem:[%s196 + $0x1d8] sm:$0xff]
        %v259 = vld [vmem:[%s196 + $0x1e0] sm:$0xff]
        %v260 = vld [vmem:[%s196 + $0x1e8] sm:$0xff]
        %v261 = vld [vmem:[%s196 + $0x1f0] sm:$0xff]
        %v262 = vld [vmem:[%s196 + $0x1f8] sm:$0xff]
        %v263 = vlaneseq
        %v264 = vand.u32 %v263, 127
        %266 = vset.pattern.permute.xlu0 3
        %267 = vperm.xlu0 %266, %v199
        %v268 = vpop.permute.xlu0 %267
        %271 = vset.pattern.permute.xlu0 3
        %272 = vperm.xlu0 %271, %v200
        %v273 = vpop.permute.xlu0 %272
        %276 = vset.pattern.permute.xlu0 3
        %277 = vperm.xlu0 %276, %v201
        %v278 = vpop.permute.xlu0 %277
        %281 = vset.pattern.permute.xlu0 3
        %282 = vperm.xlu0 %281, %v202
        %v283 = vpop.permute.xlu0 %282
        %286 = vset.pattern.permute.xlu0 3
        %287 = vperm.xlu0 %286, %v203
        %v288 = vpop.permute.xlu0 %287
        %291 = vset.pattern.permute.xlu0 3
        %292 = vperm.xlu0 %291, %v204
        %v293 = vpop.permute.xlu0 %292
        %296 = vset.pattern.permute.xlu0 3
        %297 = vperm.xlu0 %296, %v205
        %v298 = vpop.permute.xlu0 %297
        %301 = vset.pattern.permute.xlu0 3
        %302 = vperm.xlu0 %301, %v206
        %v303 = vpop.permute.xlu0 %302
        %306 = vset.pattern.permute.xlu0 3
        %307 = vperm.xlu0 %306, %v207
        %v308 = vpop.permute.xlu0 %307
        %311 = vset.pattern.permute.xlu0 3
        %312 = vperm.xlu0 %311, %v208
        %v313 = vpop.permute.xlu0 %312
        %316 = vset.pattern.permute.xlu0 3
        %317 = vperm.xlu0 %316, %v209
        %v318 = vpop.permute.xlu0 %317
        %321 = vset.pattern.permute.xlu0 3
        %322 = vperm.xlu0 %321, %v210
        %v323 = vpop.permute.xlu0 %322
        %326 = vset.pattern.permute.xlu0 3
        %327 = vperm.xlu0 %326, %v211
        %v328 = vpop.permute.xlu0 %327
        %331 = vset.pattern.permute.xlu0 3
        %332 = vperm.xlu0 %331, %v212
        %v333 = vpop.permute.xlu0 %332
        %336 = vset.pattern.permute.xlu0 3
        %337 = vperm.xlu0 %336, %v213
        %v338 = vpop.permute.xlu0 %337
        %341 = vset.pattern.permute.xlu0 3
        %342 = vperm.xlu0 %341, %v214
        %v343 = vpop.permute.xlu0 %342
        %346 = vset.pattern.permute.xlu0 3
        %347 = vperm.xlu0 %346, %v215
        %v348 = vpop.permute.xlu0 %347
        %351 = vset.pattern.permute.xlu0 3
        %352 = vperm.xlu0 %351, %v216
        %v353 = vpop.permute.xlu0 %352
        %356 = vset.pattern.permute.xlu0 3
        %357 = vperm.xlu0 %356, %v217
        %v358 = vpop.permute.xlu0 %357
        %361 = vset.pattern.permute.xlu0 3
        %362 = vperm.xlu0 %361, %v218
        %v363 = vpop.permute.xlu0 %362
        %366 = vset.pattern.permute.xlu0 3
        %367 = vperm.xlu0 %366, %v219
        %v368 = vpop.permute.xlu0 %367
        %371 = vset.pattern.permute.xlu0 3
        %372 = vperm.xlu0 %371, %v220
        %v373 = vpop.permute.xlu0 %372
        %376 = vset.pattern.permute.xlu0 3
        %377 = vperm.xlu0 %376, %v221
        %v378 = vpop.permute.xlu0 %377
        %381 = vset.pattern.permute.xlu0 3
        %382 = vperm.xlu0 %381, %v222
        %v383 = vpop.permute.xlu0 %382
        %386 = vset.pattern.permute.xlu0 3
        %387 = vperm.xlu0 %386, %v223
        %v388 = vpop.permute.xlu0 %387
        %391 = vset.pattern.permute.xlu0 3
        %392 = vperm.xlu0 %391, %v224
        %v393 = vpop.permute.xlu0 %392
        %396 = vset.pattern.permute.xlu0 3
        %397 = vperm.xlu0 %396, %v225
        %v398 = vpop.permute.xlu0 %397
        %401 = vset.pattern.permute.xlu0 3
        %402 = vperm.xlu0 %401, %v226
        %v403 = vpop.permute.xlu0 %402
        %406 = vset.pattern.permute.xlu0 3
        %407 = vperm.xlu0 %406, %v227
        %v408 = vpop.permute.xlu0 %407
        %411 = vset.pattern.permute.xlu0 3
        %412 = vperm.xlu0 %411, %v228
        %v413 = vpop.permute.xlu0 %412
        %416 = vset.pattern.permute.xlu0 3
        %417 = vperm.xlu0 %416, %v229
        %v418 = vpop.permute.xlu0 %417
        %421 = vset.pattern.permute.xlu0 3
        %422 = vperm.xlu0 %421, %v230
        %v423 = vpop.permute.xlu0 %422
        %426 = vset.pattern.permute.xlu0 3
        %427 = vperm.xlu0 %426, %v231
        %v428 = vpop.permute.xlu0 %427
        %431 = vset.pattern.permute.xlu0 3
        %432 = vperm.xlu0 %431, %v232
        %v433 = vpop.permute.xlu0 %432
        %436 = vset.pattern.permute.xlu0 3
        %437 = vperm.xlu0 %436, %v233
        %v438 = vpop.permute.xlu0 %437
        %441 = vset.pattern.permute.xlu0 3
        %442 = vperm.xlu0 %441, %v234
        %v443 = vpop.permute.xlu0 %442
        %446 = vset.pattern.permute.xlu0 3
        %447 = vperm.xlu0 %446, %v235
        %v448 = vpop.permute.xlu0 %447
        %451 = vset.pattern.permute.xlu0 3
        %452 = vperm.xlu0 %451, %v236
        %v453 = vpop.permute.xlu0 %452
        %456 = vset.pattern.permute.xlu0 3
        %457 = vperm.xlu0 %456, %v237
        %v458 = vpop.permute.xlu0 %457
        %461 = vset.pattern.permute.xlu0 3
        %462 = vperm.xlu0 %461, %v238
        %v463 = vpop.permute.xlu0 %462
        %466 = vset.pattern.permute.xlu0 3
        %467 = vperm.xlu0 %466, %v239
        %v468 = vpop.permute.xlu0 %467
        %471 = vset.pattern.permute.xlu0 3
        %472 = vperm.xlu0 %471, %v240
        %v473 = vpop.permute.xlu0 %472
        %476 = vset.pattern.permute.xlu0 3
        %477 = vperm.xlu0 %476, %v241
        %v478 = vpop.permute.xlu0 %477
        %481 = vset.pattern.permute.xlu0 3
        %482 = vperm.xlu0 %481, %v242
        %v483 = vpop.permute.xlu0 %482
        %486 = vset.pattern.permute.xlu0 3
        %487 = vperm.xlu0 %486, %v243
        %v488 = vpop.permute.xlu0 %487
        %491 = vset.pattern.permute.xlu0 3
        %492 = vperm.xlu0 %491, %v244
        %v493 = vpop.permute.xlu0 %492
        %496 = vset.pattern.permute.xlu0 3
        %497 = vperm.xlu0 %496, %v245
        %v498 = vpop.permute.xlu0 %497
        %501 = vset.pattern.permute.xlu0 3
        %502 = vperm.xlu0 %501, %v246
        %v503 = vpop.permute.xlu0 %502
        %506 = vset.pattern.permute.xlu0 3
        %507 = vperm.xlu0 %506, %v247
        %v508 = vpop.permute.xlu0 %507
        %511 = vset.pattern.permute.xlu0 3
        %512 = vperm.xlu0 %511, %v248
        %v513 = vpop.permute.xlu0 %512
        %516 = vset.pattern.permute.xlu0 3
        %517 = vperm.xlu0 %516, %v249
        %v518 = vpop.permute.xlu0 %517
        %521 = vset.pattern.permute.xlu0 3
        %522 = vperm.xlu0 %521, %v250
        %v523 = vpop.permute.xlu0 %522
        %526 = vset.pattern.permute.xlu0 3
        %527 = vperm.xlu0 %526, %v251
        %v528 = vpop.permute.xlu0 %527
        %531 = vset.pattern.permute.xlu0 3
        %532 = vperm.xlu0 %531, %v252
        %v533 = vpop.permute.xlu0 %532
        %536 = vset.pattern.permute.xlu0 3
        %537 = vperm.xlu0 %536, %v253
        %v538 = vpop.permute.xlu0 %537
        %541 = vset.pattern.permute.xlu0 3
        %542 = vperm.xlu0 %541, %v254
        %v543 = vpop.permute.xlu0 %542
        %546 = vset.pattern.permute.xlu0 3
        %547 = vperm.xlu0 %546, %v255
        %v548 = vpop.permute.xlu0 %547
        %551 = vset.pattern.permute.xlu0 3
        %552 = vperm.xlu0 %551, %v256
        %v553 = vpop.permute.xlu0 %552
        %556 = vset.pattern.permute.xlu0 3
        %557 = vperm.xlu0 %556, %v257
        %v558 = vpop.permute.xlu0 %557
        %561 = vset.pattern.permute.xlu0 3
        %562 = vperm.xlu0 %561, %v258
        %v563 = vpop.permute.xlu0 %562
        %566 = vset.pattern.permute.xlu0 3
        %567 = vperm.xlu0 %566, %v259
        %v568 = vpop.permute.xlu0 %567
        %571 = vset.pattern.permute.xlu0 3
        %572 = vperm.xlu0 %571, %v260
        %v573 = vpop.permute.xlu0 %572
        %576 = vset.pattern.permute.xlu0 3
        %577 = vperm.xlu0 %576, %v261
        %v578 = vpop.permute.xlu0 %577
        %581 = vset.pattern.permute.xlu0 3
        %582 = vperm.xlu0 %581, %v262
        %v583 = vpop.permute.xlu0 %582
        %585 = vset.pattern.permute.xlu0 2
        %586 = vperm.xlu0 %585, %v199
        %v587 = vpop.permute.xlu0 %586
        %589 = vset.pattern.permute.xlu0 2
        %590 = vperm.xlu0 %589, %v200
        %v591 = vpop.permute.xlu0 %590
        %593 = vset.pattern.permute.xlu0 2
        %594 = vperm.xlu0 %593, %v201
        %v595 = vpop.permute.xlu0 %594
        %597 = vset.pattern.permute.xlu0 2
        %598 = vperm.xlu0 %597, %v202
        %v599 = vpop.permute.xlu0 %598
        %601 = vset.pattern.permute.xlu0 2
        %602 = vperm.xlu0 %601, %v203
        %v603 = vpop.permute.xlu0 %602
        %605 = vset.pattern.permute.xlu0 2
        %606 = vperm.xlu0 %605, %v204
        %v607 = vpop.permute.xlu0 %606
        %609 = vset.pattern.permute.xlu0 2
        %610 = vperm.xlu0 %609, %v205
        %v611 = vpop.permute.xlu0 %610
        %613 = vset.pattern.permute.xlu0 2
        %614 = vperm.xlu0 %613, %v206
        %v615 = vpop.permute.xlu0 %614
        %617 = vset.pattern.permute.xlu0 2
        %618 = vperm.xlu0 %617, %v207
        %v619 = vpop.permute.xlu0 %618
        %621 = vset.pattern.permute.xlu0 2
        %622 = vperm.xlu0 %621, %v208
        %v623 = vpop.permute.xlu0 %622
        %625 = vset.pattern.permute.xlu0 2
        %626 = vperm.xlu0 %625, %v209
        %v627 = vpop.permute.xlu0 %626
        %629 = vset.pattern.permute.xlu0 2
        %630 = vperm.xlu0 %629, %v210
        %v631 = vpop.permute.xlu0 %630
        %633 = vset.pattern.permute.xlu0 2
        %634 = vperm.xlu0 %633, %v211
        %v635 = vpop.permute.xlu0 %634
        %637 = vset.pattern.permute.xlu0 2
        %638 = vperm.xlu0 %637, %v212
        %v639 = vpop.permute.xlu0 %638
        %641 = vset.pattern.permute.xlu0 2
        %642 = vperm.xlu0 %641, %v213
        %v643 = vpop.permute.xlu0 %642
        %645 = vset.pattern.permute.xlu0 2
        %646 = vperm.xlu0 %645, %v214
        %v647 = vpop.permute.xlu0 %646
        %649 = vset.pattern.permute.xlu0 2
        %650 = vperm.xlu0 %649, %v215
        %v651 = vpop.permute.xlu0 %650
        %653 = vset.pattern.permute.xlu0 2
        %654 = vperm.xlu0 %653, %v216
        %v655 = vpop.permute.xlu0 %654
        %657 = vset.pattern.permute.xlu0 2
        %658 = vperm.xlu0 %657, %v217
        %v659 = vpop.permute.xlu0 %658
        %661 = vset.pattern.permute.xlu0 2
        %662 = vperm.xlu0 %661, %v218
        %v663 = vpop.permute.xlu0 %662
        %665 = vset.pattern.permute.xlu0 2
        %666 = vperm.xlu0 %665, %v219
        %v667 = vpop.permute.xlu0 %666
        %669 = vset.pattern.permute.xlu0 2
        %670 = vperm.xlu0 %669, %v220
        %v671 = vpop.permute.xlu0 %670
        %673 = vset.pattern.permute.xlu0 2
        %674 = vperm.xlu0 %673, %v221
        %v675 = vpop.permute.xlu0 %674
        %677 = vset.pattern.permute.xlu0 2
        %678 = vperm.xlu0 %677, %v222
        %v679 = vpop.permute.xlu0 %678
        %681 = vset.pattern.permute.xlu0 2
        %682 = vperm.xlu0 %681, %v223
        %v683 = vpop.permute.xlu0 %682
        %685 = vset.pattern.permute.xlu0 2
        %686 = vperm.xlu0 %685, %v224
        %v687 = vpop.permute.xlu0 %686
        %689 = vset.pattern.permute.xlu0 2
        %690 = vperm.xlu0 %689, %v225
        %v691 = vpop.permute.xlu0 %690
        %693 = vset.pattern.permute.xlu0 2
        %694 = vperm.xlu0 %693, %v226
        %v695 = vpop.permute.xlu0 %694
        %697 = vset.pattern.permute.xlu0 2
        %698 = vperm.xlu0 %697, %v227
        %v699 = vpop.permute.xlu0 %698
        %701 = vset.pattern.permute.xlu0 2
        %702 = vperm.xlu0 %701, %v228
        %v703 = vpop.permute.xlu0 %702
        %705 = vset.pattern.permute.xlu0 2
        %706 = vperm.xlu0 %705, %v229
        %v707 = vpop.permute.xlu0 %706
        %709 = vset.pattern.permute.xlu0 2
        %710 = vperm.xlu0 %709, %v230
        %v711 = vpop.permute.xlu0 %710
        %713 = vset.pattern.permute.xlu0 2
        %714 = vperm.xlu0 %713, %v231
        %v715 = vpop.permute.xlu0 %714
        %717 = vset.pattern.permute.xlu0 2
        %718 = vperm.xlu0 %717, %v232
        %v719 = vpop.permute.xlu0 %718
        %721 = vset.pattern.permute.xlu0 2
        %722 = vperm.xlu0 %721, %v233
        %v723 = vpop.permute.xlu0 %722
        %725 = vset.pattern.permute.xlu0 2
        %726 = vperm.xlu0 %725, %v234
        %v727 = vpop.permute.xlu0 %726
        %729 = vset.pattern.permute.xlu0 2
        %730 = vperm.xlu0 %729, %v235
        %v731 = vpop.permute.xlu0 %730
        %733 = vset.pattern.permute.xlu0 2
        %734 = vperm.xlu0 %733, %v236
        %v735 = vpop.permute.xlu0 %734
        %737 = vset.pattern.permute.xlu0 2
        %738 = vperm.xlu0 %737, %v237
        %v739 = vpop.permute.xlu0 %738
        %741 = vset.pattern.permute.xlu0 2
        %742 = vperm.xlu0 %741, %v238
        %v743 = vpop.permute.xlu0 %742
        %745 = vset.pattern.permute.xlu0 2
        %746 = vperm.xlu0 %745, %v239
        %v747 = vpop.permute.xlu0 %746
        %749 = vset.pattern.permute.xlu0 2
        %750 = vperm.xlu0 %749, %v240
        %v751 = vpop.permute.xlu0 %750
        %753 = vset.pattern.permute.xlu0 2
        %754 = vperm.xlu0 %753, %v241
        %v755 = vpop.permute.xlu0 %754
        %757 = vset.pattern.permute.xlu0 2
        %758 = vperm.xlu0 %757, %v242
        %v759 = vpop.permute.xlu0 %758
        %761 = vset.pattern.permute.xlu0 2
        %762 = vperm.xlu0 %761, %v243
        %v763 = vpop.permute.xlu0 %762
        %765 = vset.pattern.permute.xlu0 2
        %766 = vperm.xlu0 %765, %v244
        %v767 = vpop.permute.xlu0 %766
        %769 = vset.pattern.permute.xlu0 2
        %770 = vperm.xlu0 %769, %v245
        %v771 = vpop.permute.xlu0 %770
        %773 = vset.pattern.permute.xlu0 2
        %774 = vperm.xlu0 %773, %v246
        %v775 = vpop.permute.xlu0 %774
        %777 = vset.pattern.permute.xlu0 2
        %778 = vperm.xlu0 %777, %v247
        %v779 = vpop.permute.xlu0 %778
        %781 = vset.pattern.permute.xlu0 2
        %782 = vperm.xlu0 %781, %v248
        %v783 = vpop.permute.xlu0 %782
        %785 = vset.pattern.permute.xlu0 2
        %786 = vperm.xlu0 %785, %v249
        %v787 = vpop.permute.xlu0 %786
        %789 = vset.pattern.permute.xlu0 2
        %790 = vperm.xlu0 %789, %v250
        %v791 = vpop.permute.xlu0 %790
        %793 = vset.pattern.permute.xlu0 2
        %794 = vperm.xlu0 %793, %v251
        %v795 = vpop.permute.xlu0 %794
        %797 = vset.pattern.permute.xlu0 2
        %798 = vperm.xlu0 %797, %v252
        %v799 = vpop.permute.xlu0 %798
        %801 = vset.pattern.permute.xlu0 2
        %802 = vperm.xlu0 %801, %v253
        %v803 = vpop.permute.xlu0 %802
        %805 = vset.pattern.permute.xlu0 2
        %806 = vperm.xlu0 %805, %v254
        %v807 = vpop.permute.xlu0 %806
        %809 = vset.pattern.permute.xlu0 2
        %810 = vperm.xlu0 %809, %v255
        %v811 = vpop.permute.xlu0 %810
        %813 = vset.pattern.permute.xlu0 2
        %814 = vperm.xlu0 %813, %v256
        %v815 = vpop.permute.xlu0 %814
        %817 = vset.pattern.permute.xlu0 2
        %818 = vperm.xlu0 %817, %v257
        %v819 = vpop.permute.xlu0 %818
        %821 = vset.pattern.permute.xlu0 2
        %822 = vperm.xlu0 %821, %v258
        %v823 = vpop.permute.xlu0 %822
        %825 = vset.pattern.permute.xlu0 2
        %826 = vperm.xlu0 %825, %v259
        %v827 = vpop.permute.xlu0 %826
        %829 = vset.pattern.permute.xlu0 2
        %830 = vperm.xlu0 %829, %v260
        %v831 = vpop.permute.xlu0 %830
        %833 = vset.pattern.permute.xlu0 2
        %834 = vperm.xlu0 %833, %v261
        %v835 = vpop.permute.xlu0 %834
        %837 = vset.pattern.permute.xlu0 2
        %838 = vperm.xlu0 %837, %v262
        %v839 = vpop.permute.xlu0 %838
        %vm841 = vcmp.lt.s32.totalorder %v264, 96
        %v842 = vsel %vm841, %v587, %v268
        %v843 = vsel %vm841, %v591, %v273
        %v844 = vsel %vm841, %v595, %v278
        %v845 = vsel %vm841, %v599, %v283
        %v846 = vsel %vm841, %v603, %v288
        %v847 = vsel %vm841, %v607, %v293
        %v848 = vsel %vm841, %v611, %v298
        %v849 = vsel %vm841, %v615, %v303
        %v850 = vsel %vm841, %v619, %v308
        %v851 = vsel %vm841, %v623, %v313
        %v852 = vsel %vm841, %v627, %v318
        %v853 = vsel %vm841, %v631, %v323
        %v854 = vsel %vm841, %v635, %v328
        %v855 = vsel %vm841, %v639, %v333
        %v856 = vsel %vm841, %v643, %v338
        %v857 = vsel %vm841, %v647, %v343
        %v858 = vsel %vm841, %v651, %v348
        %v859 = vsel %vm841, %v655, %v353
        %v860 = vsel %vm841, %v659, %v358
        %v861 = vsel %vm841, %v663, %v363
        %v862 = vsel %vm841, %v667, %v368
        %v863 = vsel %vm841, %v671, %v373
        %v864 = vsel %vm841, %v675, %v378
        %v865 = vsel %vm841, %v679, %v383
        %v866 = vsel %vm841, %v683, %v388
        %v867 = vsel %vm841, %v687, %v393
        %v868 = vsel %vm841, %v691, %v398
        %v869 = vsel %vm841, %v695, %v403
        %v870 = vsel %vm841, %v699, %v408
        %v871 = vsel %vm841, %v703, %v413
        %v872 = vsel %vm841, %v707, %v418
        %v873 = vsel %vm841, %v711, %v423
        %v874 = vsel %vm841, %v715, %v428
        %v875 = vsel %vm841, %v719, %v433
        %v876 = vsel %vm841, %v723, %v438
        %v877 = vsel %vm841, %v727, %v443
        %v878 = vsel %vm841, %v731, %v448
        %v879 = vsel %vm841, %v735, %v453
        %v880 = vsel %vm841, %v739, %v458
        %v881 = vsel %vm841, %v743, %v463
        %v882 = vsel %vm841, %v747, %v468
        %v883 = vsel %vm841, %v751, %v473
        %v884 = vsel %vm841, %v755, %v478
        %v885 = vsel %vm841, %v759, %v483
        %v886 = vsel %vm841, %v763, %v488
        %v887 = vsel %vm841, %v767, %v493
        %v888 = vsel %vm841, %v771, %v498
        %v889 = vsel %vm841, %v775, %v503
        %v890 = vsel %vm841, %v779, %v508
        %v891 = vsel %vm841, %v783, %v513
        %v892 = vsel %vm841, %v787, %v518
        %v893 = vsel %vm841, %v791, %v523
        %v894 = vsel %vm841, %v795, %v528
        %v895 = vsel %vm841, %v799, %v533
        %v896 = vsel %vm841, %v803, %v538
        %v897 = vsel %vm841, %v807, %v543
        %v898 = vsel %vm841, %v811, %v548
        %v899 = vsel %vm841, %v815, %v553
        %v900 = vsel %vm841, %v819, %v558
        %v901 = vsel %vm841, %v823, %v563
        %v902 = vsel %vm841, %v827, %v568
        %v903 = vsel %vm841, %v831, %v573
        %v904 = vsel %vm841, %v835, %v578
        %v905 = vsel %vm841, %v839, %v583
        %906 = vset.pattern.permute.xlu0 1
        %907 = vperm.xlu0 %906, %v199
        %v908 = vpop.permute.xlu0 %907
        %910 = vset.pattern.permute.xlu0 1
        %911 = vperm.xlu0 %910, %v200
        %v912 = vpop.permute.xlu0 %911
        %914 = vset.pattern.permute.xlu0 1
        %915 = vperm.xlu0 %914, %v201
        %v916 = vpop.permute.xlu0 %915
        %918 = vset.pattern.permute.xlu0 1
        %919 = vperm.xlu0 %918, %v202
        %v920 = vpop.permute.xlu0 %919
        %922 = vset.pattern.permute.xlu0 1
        %923 = vperm.xlu0 %922, %v203
        %v924 = vpop.permute.xlu0 %923
        %926 = vset.pattern.permute.xlu0 1
        %927 = vperm.xlu0 %926, %v204
        %v928 = vpop.permute.xlu0 %927
        %930 = vset.pattern.permute.xlu0 1
        %931 = vperm.xlu0 %930, %v205
        %v932 = vpop.permute.xlu0 %931
        %934 = vset.pattern.permute.xlu0 1
        %935 = vperm.xlu0 %934, %v206
        %v936 = vpop.permute.xlu0 %935
        %938 = vset.pattern.permute.xlu0 1
        %939 = vperm.xlu0 %938, %v207
        %v940 = vpop.permute.xlu0 %939
        %942 = vset.pattern.permute.xlu0 1
        %943 = vperm.xlu0 %942, %v208
        %v944 = vpop.permute.xlu0 %943
        %946 = vset.pattern.permute.xlu0 1
        %947 = vperm.xlu0 %946, %v209
        %v948 = vpop.permute.xlu0 %947
        %950 = vset.pattern.permute.xlu0 1
        %951 = vperm.xlu0 %950, %v210
        %v952 = vpop.permute.xlu0 %951
        %954 = vset.pattern.permute.xlu0 1
        %955 = vperm.xlu0 %954, %v211
        %v956 = vpop.permute.xlu0 %955
        %958 = vset.pattern.permute.xlu0 1
        %959 = vperm.xlu0 %958, %v212
        %v960 = vpop.permute.xlu0 %959
        %962 = vset.pattern.permute.xlu0 1
        %963 = vperm.xlu0 %962, %v213
        %v964 = vpop.permute.xlu0 %963
        %966 = vset.pattern.permute.xlu0 1
        %967 = vperm.xlu0 %966, %v214
        %v968 = vpop.permute.xlu0 %967
        %970 = vset.pattern.permute.xlu0 1
        %971 = vperm.xlu0 %970, %v215
        %v972 = vpop.permute.xlu0 %971
        %974 = vset.pattern.permute.xlu0 1
        %975 = vperm.xlu0 %974, %v216
        %v976 = vpop.permute.xlu0 %975
        %978 = vset.pattern.permute.xlu0 1
        %979 = vperm.xlu0 %978, %v217
        %v980 = vpop.permute.xlu0 %979
        %982 = vset.pattern.permute.xlu0 1
        %983 = vperm.xlu0 %982, %v218
        %v984 = vpop.permute.xlu0 %983
        %986 = vset.pattern.permute.xlu0 1
        %987 = vperm.xlu0 %986, %v219
        %v988 = vpop.permute.xlu0 %987
        %990 = vset.pattern.permute.xlu0 1
        %991 = vperm.xlu0 %990, %v220
        %v992 = vpop.permute.xlu0 %991
        %994 = vset.pattern.permute.xlu0 1
        %995 = vperm.xlu0 %994, %v221
        %v996 = vpop.permute.xlu0 %995
        %998 = vset.pattern.permute.xlu0 1
        %999 = vperm.xlu0 %998, %v222
        %v1000 = vpop.permute.xlu0 %999
        %1002 = vset.pattern.permute.xlu0 1
        %1003 = vperm.xlu0 %1002, %v223
        %v1004 = vpop.permute.xlu0 %1003
        %1006 = vset.pattern.permute.xlu0 1
        %1007 = vperm.xlu0 %1006, %v224
        %v1008 = vpop.permute.xlu0 %1007
        %1010 = vset.pattern.permute.xlu0 1
        %1011 = vperm.xlu0 %1010, %v225
        %v1012 = vpop.permute.xlu0 %1011
        %1014 = vset.pattern.permute.xlu0 1
        %1015 = vperm.xlu0 %1014, %v226
        %v1016 = vpop.permute.xlu0 %1015
        %1018 = vset.pattern.permute.xlu0 1
        %1019 = vperm.xlu0 %1018, %v227
        %v1020 = vpop.permute.xlu0 %1019
        %1022 = vset.pattern.permute.xlu0 1
        %1023 = vperm.xlu0 %1022, %v228
        %v1024 = vpop.permute.xlu0 %1023
        %1026 = vset.pattern.permute.xlu0 1
        %1027 = vperm.xlu0 %1026, %v229
        %v1028 = vpop.permute.xlu0 %1027
        %1030 = vset.pattern.permute.xlu0 1
        %1031 = vperm.xlu0 %1030, %v230
        %v1032 = vpop.permute.xlu0 %1031
        %1034 = vset.pattern.permute.xlu0 1
        %1035 = vperm.xlu0 %1034, %v231
        %v1036 = vpop.permute.xlu0 %1035
        %1038 = vset.pattern.permute.xlu0 1
        %1039 = vperm.xlu0 %1038, %v232
        %v1040 = vpop.permute.xlu0 %1039
        %1042 = vset.pattern.permute.xlu0 1
        %1043 = vperm.xlu0 %1042, %v233
        %v1044 = vpop.permute.xlu0 %1043
        %1046 = vset.pattern.permute.xlu0 1
        %1047 = vperm.xlu0 %1046, %v234
        %v1048 = vpop.permute.xlu0 %1047
        %1050 = vset.pattern.permute.xlu0 1
        %1051 = vperm.xlu0 %1050, %v235
        %v1052 = vpop.permute.xlu0 %1051
        %1054 = vset.pattern.permute.xlu0 1
        %1055 = vperm.xlu0 %1054, %v236
        %v1056 = vpop.permute.xlu0 %1055
        %1058 = vset.pattern.permute.xlu0 1
        %1059 = vperm.xlu0 %1058, %v237
        %v1060 = vpop.permute.xlu0 %1059
        %1062 = vset.pattern.permute.xlu0 1
        %1063 = vperm.xlu0 %1062, %v238
        %v1064 = vpop.permute.xlu0 %1063
        %1066 = vset.pattern.permute.xlu0 1
        %1067 = vperm.xlu0 %1066, %v239
        %v1068 = vpop.permute.xlu0 %1067
        %1070 = vset.pattern.permute.xlu0 1
        %1071 = vperm.xlu0 %1070, %v240
        %v1072 = vpop.permute.xlu0 %1071
        %1074 = vset.pattern.permute.xlu0 1
        %1075 = vperm.xlu0 %1074, %v241
        %v1076 = vpop.permute.xlu0 %1075
        %1078 = vset.pattern.permute.xlu0 1
        %1079 = vperm.xlu0 %1078, %v242
        %v1080 = vpop.permute.xlu0 %1079
        %1082 = vset.pattern.permute.xlu0 1
        %1083 = vperm.xlu0 %1082, %v243
        %v1084 = vpop.permute.xlu0 %1083
        %1086 = vset.pattern.permute.xlu0 1
        %1087 = vperm.xlu0 %1086, %v244
        %v1088 = vpop.permute.xlu0 %1087
        %1090 = vset.pattern.permute.xlu0 1
        %1091 = vperm.xlu0 %1090, %v245
        %v1092 = vpop.permute.xlu0 %1091
        %1094 = vset.pattern.permute.xlu0 1
        %1095 = vperm.xlu0 %1094, %v246
        %v1096 = vpop.permute.xlu0 %1095
        %1098 = vset.pattern.permute.xlu0 1
        %1099 = vperm.xlu0 %1098, %v247
        %v1100 = vpop.permute.xlu0 %1099
        %1102 = vset.pattern.permute.xlu0 1
        %1103 = vperm.xlu0 %1102, %v248
        %v1104 = vpop.permute.xlu0 %1103
        %1106 = vset.pattern.permute.xlu0 1
        %1107 = vperm.xlu0 %1106, %v249
        %v1108 = vpop.permute.xlu0 %1107
        %1110 = vset.pattern.permute.xlu0 1
        %1111 = vperm.xlu0 %1110, %v250
        %v1112 = vpop.permute.xlu0 %1111
        %1114 = vset.pattern.permute.xlu0 1
        %1115 = vperm.xlu0 %1114, %v251
        %v1116 = vpop.permute.xlu0 %1115
        %1118 = vset.pattern.permute.xlu0 1
        %1119 = vperm.xlu0 %1118, %v252
        %v1120 = vpop.permute.xlu0 %1119
        %1122 = vset.pattern.permute.xlu0 1
        %1123 = vperm.xlu0 %1122, %v253
        %v1124 = vpop.permute.xlu0 %1123
        %1126 = vset.pattern.permute.xlu0 1
        %1127 = vperm.xlu0 %1126, %v254
        %v1128 = vpop.permute.xlu0 %1127
        %1130 = vset.pattern.permute.xlu0 1
        %1131 = vperm.xlu0 %1130, %v255
        %v1132 = vpop.permute.xlu0 %1131
        %1134 = vset.pattern.permute.xlu0 1
        %1135 = vperm.xlu0 %1134, %v256
        %v1136 = vpop.permute.xlu0 %1135
        %1138 = vset.pattern.permute.xlu0 1
        %1139 = vperm.xlu0 %1138, %v257
        %v1140 = vpop.permute.xlu0 %1139
        %1142 = vset.pattern.permute.xlu0 1
        %1143 = vperm.xlu0 %1142, %v258
        %v1144 = vpop.permute.xlu0 %1143
        %1146 = vset.pattern.permute.xlu0 1
        %1147 = vperm.xlu0 %1146, %v259
        %v1148 = vpop.permute.xlu0 %1147
        %1150 = vset.pattern.permute.xlu0 1
        %1151 = vperm.xlu0 %1150, %v260
        %v1152 = vpop.permute.xlu0 %1151
        %1154 = vset.pattern.permute.xlu0 1
        %1155 = vperm.xlu0 %1154, %v261
        %v1156 = vpop.permute.xlu0 %1155
        %1158 = vset.pattern.permute.xlu0 1
        %1159 = vperm.xlu0 %1158, %v262
        %v1160 = vpop.permute.xlu0 %1159
        %vm1162 = vcmp.lt.s32.totalorder %v264, 64
        %v1163 = vsel %vm1162, %v908, %v842
        %v1164 = vsel %vm1162, %v912, %v843
        %v1165 = vsel %vm1162, %v916, %v844
        %v1166 = vsel %vm1162, %v920, %v845
        %v1167 = vsel %vm1162, %v924, %v846
        %v1168 = vsel %vm1162, %v928, %v847
        %v1169 = vsel %vm1162, %v932, %v848
        %v1170 = vsel %vm1162, %v936, %v849
        %v1171 = vsel %vm1162, %v940, %v850
        %v1172 = vsel %vm1162, %v944, %v851
        %v1173 = vsel %vm1162, %v948, %v852
        %v1174 = vsel %vm1162, %v952, %v853
        %v1175 = vsel %vm1162, %v956, %v854
        %v1176 = vsel %vm1162, %v960, %v855
        %v1177 = vsel %vm1162, %v964, %v856
        %v1178 = vsel %vm1162, %v968, %v857
        %v1179 = vsel %vm1162, %v972, %v858
        %v1180 = vsel %vm1162, %v976, %v859
        %v1181 = vsel %vm1162, %v980, %v860
        %v1182 = vsel %vm1162, %v984, %v861
        %v1183 = vsel %vm1162, %v988, %v862
        %v1184 = vsel %vm1162, %v992, %v863
        %v1185 = vsel %vm1162, %v996, %v864
        %v1186 = vsel %vm1162, %v1000, %v865
        %v1187 = vsel %vm1162, %v1004, %v866
        %v1188 = vsel %vm1162, %v1008, %v867
        %v1189 = vsel %vm1162, %v1012, %v868
        %v1190 = vsel %vm1162, %v1016, %v869
        %v1191 = vsel %vm1162, %v1020, %v870
        %v1192 = vsel %vm1162, %v1024, %v871
        %v1193 = vsel %vm1162, %v1028, %v872
        %v1194 = vsel %vm1162, %v1032, %v873
        %v1195 = vsel %vm1162, %v1036, %v874
        %v1196 = vsel %vm1162, %v1040, %v875
        %v1197 = vsel %vm1162, %v1044, %v876
        %v1198 = vsel %vm1162, %v1048, %v877
        %v1199 = vsel %vm1162, %v1052, %v878
        %v1200 = vsel %vm1162, %v1056, %v879
        %v1201 = vsel %vm1162, %v1060, %v880
        %v1202 = vsel %vm1162, %v1064, %v881
        %v1203 = vsel %vm1162, %v1068, %v882
        %v1204 = vsel %vm1162, %v1072, %v883
        %v1205 = vsel %vm1162, %v1076, %v884
        %v1206 = vsel %vm1162, %v1080, %v885
        %v1207 = vsel %vm1162, %v1084, %v886
        %v1208 = vsel %vm1162, %v1088, %v887
        %v1209 = vsel %vm1162, %v1092, %v888
        %v1210 = vsel %vm1162, %v1096, %v889
        %v1211 = vsel %vm1162, %v1100, %v890
        %v1212 = vsel %vm1162, %v1104, %v891
        %v1213 = vsel %vm1162, %v1108, %v892
        %v1214 = vsel %vm1162, %v1112, %v893
        %v1215 = vsel %vm1162, %v1116, %v894
        %v1216 = vsel %vm1162, %v1120, %v895
        %v1217 = vsel %vm1162, %v1124, %v896
        %v1218 = vsel %vm1162, %v1128, %v897
        %v1219 = vsel %vm1162, %v1132, %v898
        %v1220 = vsel %vm1162, %v1136, %v899
        %v1221 = vsel %vm1162, %v1140, %v900
        %v1222 = vsel %vm1162, %v1144, %v901
        %v1223 = vsel %vm1162, %v1148, %v902
        %v1224 = vsel %vm1162, %v1152, %v903
        %v1225 = vsel %vm1162, %v1156, %v904
        %v1226 = vsel %vm1162, %v1160, %v905
        %1227 = vset.pattern.permute.xlu0 0
        %1228 = vperm.xlu0 %1227, %v199
        %v1229 = vpop.permute.xlu0 %1228
        %1231 = vset.pattern.permute.xlu0 0
        %1232 = vperm.xlu0 %1231, %v200
        %v1233 = vpop.permute.xlu0 %1232
        %1235 = vset.pattern.permute.xlu0 0
        %1236 = vperm.xlu0 %1235, %v201
        %v1237 = vpop.permute.xlu0 %1236
        %1239 = vset.pattern.permute.xlu0 0
        %1240 = vperm.xlu0 %1239, %v202
        %v1241 = vpop.permute.xlu0 %1240
        %1243 = vset.pattern.permute.xlu0 0
        %1244 = vperm.xlu0 %1243, %v203
        %v1245 = vpop.permute.xlu0 %1244
        %1247 = vset.pattern.permute.xlu0 0
        %1248 = vperm.xlu0 %1247, %v204
        %v1249 = vpop.permute.xlu0 %1248
        %1251 = vset.pattern.permute.xlu0 0
        %1252 = vperm.xlu0 %1251, %v205
        %v1253 = vpop.permute.xlu0 %1252
        %1255 = vset.pattern.permute.xlu0 0
        %1256 = vperm.xlu0 %1255, %v206
        %v1257 = vpop.permute.xlu0 %1256
        %1259 = vset.pattern.permute.xlu0 0
        %1260 = vperm.xlu0 %1259, %v207
        %v1261 = vpop.permute.xlu0 %1260
        %1263 = vset.pattern.permute.xlu0 0
        %1264 = vperm.xlu0 %1263, %v208
        %v1265 = vpop.permute.xlu0 %1264
        %1267 = vset.pattern.permute.xlu0 0
        %1268 = vperm.xlu0 %1267, %v209
        %v1269 = vpop.permute.xlu0 %1268
        %1271 = vset.pattern.permute.xlu0 0
        %1272 = vperm.xlu0 %1271, %v210
        %v1273 = vpop.permute.xlu0 %1272
        %1275 = vset.pattern.permute.xlu0 0
        %1276 = vperm.xlu0 %1275, %v211
        %v1277 = vpop.permute.xlu0 %1276
        %1279 = vset.pattern.permute.xlu0 0
        %1280 = vperm.xlu0 %1279, %v212
        %v1281 = vpop.permute.xlu0 %1280
        %1283 = vset.pattern.permute.xlu0 0
        %1284 = vperm.xlu0 %1283, %v213
        %v1285 = vpop.permute.xlu0 %1284
        %1287 = vset.pattern.permute.xlu0 0
        %1288 = vperm.xlu0 %1287, %v214
        %v1289 = vpop.permute.xlu0 %1288
        %1291 = vset.pattern.permute.xlu0 0
        %1292 = vperm.xlu0 %1291, %v215
        %v1293 = vpop.permute.xlu0 %1292
        %1295 = vset.pattern.permute.xlu0 0
        %1296 = vperm.xlu0 %1295, %v216
        %v1297 = vpop.permute.xlu0 %1296
        %1299 = vset.pattern.permute.xlu0 0
        %1300 = vperm.xlu0 %1299, %v217
        %v1301 = vpop.permute.xlu0 %1300
        %1303 = vset.pattern.permute.xlu0 0
        %1304 = vperm.xlu0 %1303, %v218
        %v1305 = vpop.permute.xlu0 %1304
        %1307 = vset.pattern.permute.xlu0 0
        %1308 = vperm.xlu0 %1307, %v219
        %v1309 = vpop.permute.xlu0 %1308
        %1311 = vset.pattern.permute.xlu0 0
        %1312 = vperm.xlu0 %1311, %v220
        %v1313 = vpop.permute.xlu0 %1312
        %1315 = vset.pattern.permute.xlu0 0
        %1316 = vperm.xlu0 %1315, %v221
        %v1317 = vpop.permute.xlu0 %1316
        %1319 = vset.pattern.permute.xlu0 0
        %1320 = vperm.xlu0 %1319, %v222
        %v1321 = vpop.permute.xlu0 %1320
        %1323 = vset.pattern.permute.xlu0 0
        %1324 = vperm.xlu0 %1323, %v223
        %v1325 = vpop.permute.xlu0 %1324
        %1327 = vset.pattern.permute.xlu0 0
        %1328 = vperm.xlu0 %1327, %v224
        %v1329 = vpop.permute.xlu0 %1328
        %1331 = vset.pattern.permute.xlu0 0
        %1332 = vperm.xlu0 %1331, %v225
        %v1333 = vpop.permute.xlu0 %1332
        %1335 = vset.pattern.permute.xlu0 0
        %1336 = vperm.xlu0 %1335, %v226
        %v1337 = vpop.permute.xlu0 %1336
        %1339 = vset.pattern.permute.xlu0 0
        %1340 = vperm.xlu0 %1339, %v227
        %v1341 = vpop.permute.xlu0 %1340
        %1343 = vset.pattern.permute.xlu0 0
        %1344 = vperm.xlu0 %1343, %v228
        %v1345 = vpop.permute.xlu0 %1344
        %1347 = vset.pattern.permute.xlu0 0
        %1348 = vperm.xlu0 %1347, %v229
        %v1349 = vpop.permute.xlu0 %1348
        %1351 = vset.pattern.permute.xlu0 0
        %1352 = vperm.xlu0 %1351, %v230
        %v1353 = vpop.permute.xlu0 %1352
        %1355 = vset.pattern.permute.xlu0 0
        %1356 = vperm.xlu0 %1355, %v231
        %v1357 = vpop.permute.xlu0 %1356
        %1359 = vset.pattern.permute.xlu0 0
        %1360 = vperm.xlu0 %1359, %v232
        %v1361 = vpop.permute.xlu0 %1360
        %1363 = vset.pattern.permute.xlu0 0
        %1364 = vperm.xlu0 %1363, %v233
        %v1365 = vpop.permute.xlu0 %1364
        %1367 = vset.pattern.permute.xlu0 0
        %1368 = vperm.xlu0 %1367, %v234
        %v1369 = vpop.permute.xlu0 %1368
        %1371 = vset.pattern.permute.xlu0 0
        %1372 = vperm.xlu0 %1371, %v235
        %v1373 = vpop.permute.xlu0 %1372
        %1375 = vset.pattern.permute.xlu0 0
        %1376 = vperm.xlu0 %1375, %v236
        %v1377 = vpop.permute.xlu0 %1376
        %1379 = vset.pattern.permute.xlu0 0
        %1380 = vperm.xlu0 %1379, %v237
        %v1381 = vpop.permute.xlu0 %1380
        %1383 = vset.pattern.permute.xlu0 0
        %1384 = vperm.xlu0 %1383, %v238
        %v1385 = vpop.permute.xlu0 %1384
        %1387 = vset.pattern.permute.xlu0 0
        %1388 = vperm.xlu0 %1387, %v239
        %v1389 = vpop.permute.xlu0 %1388
        %1391 = vset.pattern.permute.xlu0 0
        %1392 = vperm.xlu0 %1391, %v240
        %v1393 = vpop.permute.xlu0 %1392
        %1395 = vset.pattern.permute.xlu0 0
        %1396 = vperm.xlu0 %1395, %v241
        %v1397 = vpop.permute.xlu0 %1396
        %1399 = vset.pattern.permute.xlu0 0
        %1400 = vperm.xlu0 %1399, %v242
        %v1401 = vpop.permute.xlu0 %1400
        %1403 = vset.pattern.permute.xlu0 0
        %1404 = vperm.xlu0 %1403, %v243
        %v1405 = vpop.permute.xlu0 %1404
        %1407 = vset.pattern.permute.xlu0 0
        %1408 = vperm.xlu0 %1407, %v244
        %v1409 = vpop.permute.xlu0 %1408
        %1411 = vset.pattern.permute.xlu0 0
        %1412 = vperm.xlu0 %1411, %v245
        %v1413 = vpop.permute.xlu0 %1412
        %1415 = vset.pattern.permute.xlu0 0
        %1416 = vperm.xlu0 %1415, %v246
        %v1417 = vpop.permute.xlu0 %1416
        %1419 = vset.pattern.permute.xlu0 0
        %1420 = vperm.xlu0 %1419, %v247
        %v1421 = vpop.permute.xlu0 %1420
        %1423 = vset.pattern.permute.xlu0 0
        %1424 = vperm.xlu0 %1423, %v248
        %v1425 = vpop.permute.xlu0 %1424
        %1427 = vset.pattern.permute.xlu0 0
        %1428 = vperm.xlu0 %1427, %v249
        %v1429 = vpop.permute.xlu0 %1428
        %1431 = vset.pattern.permute.xlu0 0
        %1432 = vperm.xlu0 %1431, %v250
        %v1433 = vpop.permute.xlu0 %1432
        %1435 = vset.pattern.permute.xlu0 0
        %1436 = vperm.xlu0 %1435, %v251
        %v1437 = vpop.permute.xlu0 %1436
        %1439 = vset.pattern.permute.xlu0 0
        %1440 = vperm.xlu0 %1439, %v252
        %v1441 = vpop.permute.xlu0 %1440
        %1443 = vset.pattern.permute.xlu0 0
        %1444 = vperm.xlu0 %1443, %v253
        %v1445 = vpop.permute.xlu0 %1444
        %1447 = vset.pattern.permute.xlu0 0
        %1448 = vperm.xlu0 %1447, %v254
        %v1449 = vpop.permute.xlu0 %1448
        %1451 = vset.pattern.permute.xlu0 0
        %1452 = vperm.xlu0 %1451, %v255
        %v1453 = vpop.permute.xlu0 %1452
        %1455 = vset.pattern.permute.xlu0 0
        %1456 = vperm.xlu0 %1455, %v256
        %v1457 = vpop.permute.xlu0 %1456
        %1459 = vset.pattern.permute.xlu0 0
        %1460 = vperm.xlu0 %1459, %v257
        %v1461 = vpop.permute.xlu0 %1460
        %1463 = vset.pattern.permute.xlu0 0
        %1464 = vperm.xlu0 %1463, %v258
        %v1465 = vpop.permute.xlu0 %1464
        %1467 = vset.pattern.permute.xlu0 0
        %1468 = vperm.xlu0 %1467, %v259
        %v1469 = vpop.permute.xlu0 %1468
        %1471 = vset.pattern.permute.xlu0 0
        %1472 = vperm.xlu0 %1471, %v260
        %v1473 = vpop.permute.xlu0 %1472
        %1475 = vset.pattern.permute.xlu0 0
        %1476 = vperm.xlu0 %1475, %v261
        %v1477 = vpop.permute.xlu0 %1476
        %1479 = vset.pattern.permute.xlu0 0
        %1480 = vperm.xlu0 %1479, %v262
        %v1481 = vpop.permute.xlu0 %1480
        %vm1483 = vcmp.lt.s32.totalorder %v264, 32
        %v1484 = vsel %vm1483, %v1229, %v1163
        %v1485 = vsel %vm1483, %v1233, %v1164
        %v1486 = vsel %vm1483, %v1237, %v1165
        %v1487 = vsel %vm1483, %v1241, %v1166
        %v1488 = vsel %vm1483, %v1245, %v1167
        %v1489 = vsel %vm1483, %v1249, %v1168
        %v1490 = vsel %vm1483, %v1253, %v1169
        %v1491 = vsel %vm1483, %v1257, %v1170
        %v1492 = vsel %vm1483, %v1261, %v1171
        %v1493 = vsel %vm1483, %v1265, %v1172
        %v1494 = vsel %vm1483, %v1269, %v1173
        %v1495 = vsel %vm1483, %v1273, %v1174
        %v1496 = vsel %vm1483, %v1277, %v1175
        %v1497 = vsel %vm1483, %v1281, %v1176
        %v1498 = vsel %vm1483, %v1285, %v1177
        %v1499 = vsel %vm1483, %v1289, %v1178
        %v1500 = vsel %vm1483, %v1293, %v1179
        %v1501 = vsel %vm1483, %v1297, %v1180
        %v1502 = vsel %vm1483, %v1301, %v1181
        %v1503 = vsel %vm1483, %v1305, %v1182
        %v1504 = vsel %vm1483, %v1309, %v1183
        %v1505 = vsel %vm1483, %v1313, %v1184
        %v1506 = vsel %vm1483, %v1317, %v1185
        %v1507 = vsel %vm1483, %v1321, %v1186
        %v1508 = vsel %vm1483, %v1325, %v1187
        %v1509 = vsel %vm1483, %v1329, %v1188
        %v1510 = vsel %vm1483, %v1333, %v1189
        %v1511 = vsel %vm1483, %v1337, %v1190
        %v1512 = vsel %vm1483, %v1341, %v1191
        %v1513 = vsel %vm1483, %v1345, %v1192
        %v1514 = vsel %vm1483, %v1349, %v1193
        %v1515 = vsel %vm1483, %v1353, %v1194
        %v1516 = vsel %vm1483, %v1357, %v1195
        %v1517 = vsel %vm1483, %v1361, %v1196
        %v1518 = vsel %vm1483, %v1365, %v1197
        %v1519 = vsel %vm1483, %v1369, %v1198
        %v1520 = vsel %vm1483, %v1373, %v1199
        %v1521 = vsel %vm1483, %v1377, %v1200
        %v1522 = vsel %vm1483, %v1381, %v1201
        %v1523 = vsel %vm1483, %v1385, %v1202
        %v1524 = vsel %vm1483, %v1389, %v1203
        %v1525 = vsel %vm1483, %v1393, %v1204
        %v1526 = vsel %vm1483, %v1397, %v1205
        %v1527 = vsel %vm1483, %v1401, %v1206
        %v1528 = vsel %vm1483, %v1405, %v1207
        %v1529 = vsel %vm1483, %v1409, %v1208
        %v1530 = vsel %vm1483, %v1413, %v1209
        %v1531 = vsel %vm1483, %v1417, %v1210
        %v1532 = vsel %vm1483, %v1421, %v1211
        %v1533 = vsel %vm1483, %v1425, %v1212
        %v1534 = vsel %vm1483, %v1429, %v1213
        %v1535 = vsel %vm1483, %v1433, %v1214
        %v1536 = vsel %vm1483, %v1437, %v1215
        %v1537 = vsel %vm1483, %v1441, %v1216
        %v1538 = vsel %vm1483, %v1445, %v1217
        %v1539 = vsel %vm1483, %v1449, %v1218
        %v1540 = vsel %vm1483, %v1453, %v1219
        %v1541 = vsel %vm1483, %v1457, %v1220
        %v1542 = vsel %vm1483, %v1461, %v1221
        %v1543 = vsel %vm1483, %v1465, %v1222
        %v1544 = vsel %vm1483, %v1469, %v1223
        %v1545 = vsel %vm1483, %v1473, %v1224
        %v1546 = vsel %vm1483, %v1477, %v1225
        %v1547 = vsel %vm1483, %v1481, %v1226
        %v1548 = vld [vmem:[%s1] sm:$0x1]
        %v1550 = vlaneseq
        %v1551 = vshrl.u32 %v1550, 7
        %v1552 = vsub.s32 0, %v1551
        %v1553 = vrot.slane %v1548, %v1552
        %v1555 = vsub.f32 %v1484, %v1553
        %v1556 = vsub.f32 %v1485, %v1553
        %v1557 = vsub.f32 %v1486, %v1553
        %v1558 = vsub.f32 %v1487, %v1553
        %v1559 = vsub.f32 %v1488, %v1553
        %v1560 = vsub.f32 %v1489, %v1553
        %v1561 = vsub.f32 %v1490, %v1553
        %v1562 = vsub.f32 %v1491, %v1553
        %v1563 = vsub.f32 %v1492, %v1553
        %v1564 = vsub.f32 %v1493, %v1553
        %v1565 = vsub.f32 %v1494, %v1553
        %v1566 = vsub.f32 %v1495, %v1553
        %v1567 = vsub.f32 %v1496, %v1553
        %v1568 = vsub.f32 %v1497, %v1553
        %v1569 = vsub.f32 %v1498, %v1553
        %v1570 = vsub.f32 %v1499, %v1553
        %v1571 = vsub.f32 %v1500, %v1553
        %v1572 = vsub.f32 %v1501, %v1553
        %v1573 = vsub.f32 %v1502, %v1553
        %v1574 = vsub.f32 %v1503, %v1553
        %v1575 = vsub.f32 %v1504, %v1553
        %v1576 = vsub.f32 %v1505, %v1553
        %v1577 = vsub.f32 %v1506, %v1553
        %v1578 = vsub.f32 %v1507, %v1553
        %v1579 = vsub.f32 %v1508, %v1553
        %v1580 = vsub.f32 %v1509, %v1553
        %v1581 = vsub.f32 %v1510, %v1553
        %v1582 = vsub.f32 %v1511, %v1553
        %v1583 = vsub.f32 %v1512, %v1553
        %v1584 = vsub.f32 %v1513, %v1553
        %v1585 = vsub.f32 %v1514, %v1553
        %v1586 = vsub.f32 %v1515, %v1553
        %v1587 = vsub.f32 %v1516, %v1553
        %v1588 = vsub.f32 %v1517, %v1553
        %v1589 = vsub.f32 %v1518, %v1553
        %v1590 = vsub.f32 %v1519, %v1553
        %v1591 = vsub.f32 %v1520, %v1553
        %v1592 = vsub.f32 %v1521, %v1553
        %v1593 = vsub.f32 %v1522, %v1553
        %v1594 = vsub.f32 %v1523, %v1553
        %v1595 = vsub.f32 %v1524, %v1553
        %v1596 = vsub.f32 %v1525, %v1553
        %v1597 = vsub.f32 %v1526, %v1553
        %v1598 = vsub.f32 %v1527, %v1553
        %v1599 = vsub.f32 %v1528, %v1553
        %v1600 = vsub.f32 %v1529, %v1553
        %v1601 = vsub.f32 %v1530, %v1553
        %v1602 = vsub.f32 %v1531, %v1553
        %v1603 = vsub.f32 %v1532, %v1553
        %v1604 = vsub.f32 %v1533, %v1553
        %v1605 = vsub.f32 %v1534, %v1553
        %v1606 = vsub.f32 %v1535, %v1553
        %v1607 = vsub.f32 %v1536, %v1553
        %v1608 = vsub.f32 %v1537, %v1553
        %v1609 = vsub.f32 %v1538, %v1553
        %v1610 = vsub.f32 %v1539, %v1553
        %v1611 = vsub.f32 %v1540, %v1553
        %v1612 = vsub.f32 %v1541, %v1553
        %v1613 = vsub.f32 %v1542, %v1553
        %v1614 = vsub.f32 %v1543, %v1553
        %v1615 = vsub.f32 %v1544, %v1553
        %v1616 = vsub.f32 %v1545, %v1553
        %v1617 = vsub.f32 %v1546, %v1553
        %v1618 = vsub.f32 %v1547, %v1553
        %v1619 = vld [vmem:[%s2] sm:$0x1]
        %v1621 = vlaneseq
        %v1622 = vshrl.u32 %v1621, 7
        %v1623 = vsub.s32 0, %v1622
        %v1624 = vrot.slane %v1619, %v1623
        %v1626 = vmul.f32 %v1555, %v1624
        %v1627 = vmul.f32 %v1556, %v1624
        %v1628 = vmul.f32 %v1557, %v1624
        %v1629 = vmul.f32 %v1558, %v1624
        %v1630 = vmul.f32 %v1559, %v1624
        %v1631 = vmul.f32 %v1560, %v1624
        %v1632 = vmul.f32 %v1561, %v1624
        %v1633 = vmul.f32 %v1562, %v1624
        %v1634 = vmul.f32 %v1563, %v1624
        %v1635 = vmul.f32 %v1564, %v1624
        %v1636 = vmul.f32 %v1565, %v1624
        %v1637 = vmul.f32 %v1566, %v1624
        %v1638 = vmul.f32 %v1567, %v1624
        %v1639 = vmul.f32 %v1568, %v1624
        %v1640 = vmul.f32 %v1569, %v1624
        %v1641 = vmul.f32 %v1570, %v1624
        %v1642 = vmul.f32 %v1571, %v1624
        %v1643 = vmul.f32 %v1572, %v1624
        %v1644 = vmul.f32 %v1573, %v1624
        %v1645 = vmul.f32 %v1574, %v1624
        %v1646 = vmul.f32 %v1575, %v1624
        %v1647 = vmul.f32 %v1576, %v1624
        %v1648 = vmul.f32 %v1577, %v1624
        %v1649 = vmul.f32 %v1578, %v1624
        %v1650 = vmul.f32 %v1579, %v1624
        %v1651 = vmul.f32 %v1580, %v1624
        %v1652 = vmul.f32 %v1581, %v1624
        %v1653 = vmul.f32 %v1582, %v1624
        %v1654 = vmul.f32 %v1583, %v1624
        %v1655 = vmul.f32 %v1584, %v1624
        %v1656 = vmul.f32 %v1585, %v1624
        %v1657 = vmul.f32 %v1586, %v1624
        %v1658 = vmul.f32 %v1587, %v1624
        %v1659 = vmul.f32 %v1588, %v1624
        %v1660 = vmul.f32 %v1589, %v1624
        %v1661 = vmul.f32 %v1590, %v1624
        %v1662 = vmul.f32 %v1591, %v1624
        %v1663 = vmul.f32 %v1592, %v1624
        %v1664 = vmul.f32 %v1593, %v1624
        %v1665 = vmul.f32 %v1594, %v1624
        %v1666 = vmul.f32 %v1595, %v1624
        %v1667 = vmul.f32 %v1596, %v1624
        %v1668 = vmul.f32 %v1597, %v1624
        %v1669 = vmul.f32 %v1598, %v1624
        %v1670 = vmul.f32 %v1599, %v1624
        %v1671 = vmul.f32 %v1600, %v1624
        %v1672 = vmul.f32 %v1601, %v1624
        %v1673 = vmul.f32 %v1602, %v1624
        %v1674 = vmul.f32 %v1603, %v1624
        %v1675 = vmul.f32 %v1604, %v1624
        %v1676 = vmul.f32 %v1605, %v1624
        %v1677 = vmul.f32 %v1606, %v1624
        %v1678 = vmul.f32 %v1607, %v1624
        %v1679 = vmul.f32 %v1608, %v1624
        %v1680 = vmul.f32 %v1609, %v1624
        %v1681 = vmul.f32 %v1610, %v1624
        %v1682 = vmul.f32 %v1611, %v1624
        %v1683 = vmul.f32 %v1612, %v1624
        %v1684 = vmul.f32 %v1613, %v1624
        %v1685 = vmul.f32 %v1614, %v1624
        %v1686 = vmul.f32 %v1615, %v1624
        %v1687 = vmul.f32 %v1616, %v1624
        %v1688 = vmul.f32 %v1617, %v1624
        %v1689 = vmul.f32 %v1618, %v1624
        %v1690 = vld [vmem:[%s3] sm:$0x1]
        %v1691 = vmul.f32 %v1626, %v1626
        %v1692 = vmul.f32 %v1627, %v1627
        %v1693 = vmul.f32 %v1628, %v1628
        %v1694 = vmul.f32 %v1629, %v1629
        %v1695 = vmul.f32 %v1630, %v1630
        %v1696 = vmul.f32 %v1631, %v1631
        %v1697 = vmul.f32 %v1632, %v1632
        %v1698 = vmul.f32 %v1633, %v1633
        %v1699 = vmul.f32 %v1634, %v1634
        %v1700 = vmul.f32 %v1635, %v1635
        %v1701 = vmul.f32 %v1636, %v1636
        %v1702 = vmul.f32 %v1637, %v1637
        %v1703 = vmul.f32 %v1638, %v1638
        %v1704 = vmul.f32 %v1639, %v1639
        %v1705 = vmul.f32 %v1640, %v1640
        %v1706 = vmul.f32 %v1641, %v1641
        %v1707 = vmul.f32 %v1642, %v1642
        %v1708 = vmul.f32 %v1643, %v1643
        %v1709 = vmul.f32 %v1644, %v1644
        %v1710 = vmul.f32 %v1645, %v1645
        %v1711 = vmul.f32 %v1646, %v1646
        %v1712 = vmul.f32 %v1647, %v1647
        %v1713 = vmul.f32 %v1648, %v1648
        %v1714 = vmul.f32 %v1649, %v1649
        %v1715 = vmul.f32 %v1650, %v1650
        %v1716 = vmul.f32 %v1651, %v1651
        %v1717 = vmul.f32 %v1652, %v1652
        %v1718 = vmul.f32 %v1653, %v1653
        %v1719 = vmul.f32 %v1654, %v1654
        %v1720 = vmul.f32 %v1655, %v1655
        %v1721 = vmul.f32 %v1656, %v1656
        %v1722 = vmul.f32 %v1657, %v1657
        %v1723 = vmul.f32 %v1658, %v1658
        %v1724 = vmul.f32 %v1659, %v1659
        %v1725 = vmul.f32 %v1660, %v1660
        %v1726 = vmul.f32 %v1661, %v1661
        %v1727 = vmul.f32 %v1662, %v1662
        %v1728 = vmul.f32 %v1663, %v1663
        %v1729 = vmul.f32 %v1664, %v1664
        %v1730 = vmul.f32 %v1665, %v1665
        %v1731 = vmul.f32 %v1666, %v1666
        %v1732 = vmul.f32 %v1667, %v1667
        %v1733 = vmul.f32 %v1668, %v1668
        %v1734 = vmul.f32 %v1669, %v1669
        %v1735 = vmul.f32 %v1670, %v1670
        %v1736 = vmul.f32 %v1671, %v1671
        %v1737 = vmul.f32 %v1672, %v1672
        %v1738 = vmul.f32 %v1673, %v1673
        %v1739 = vmul.f32 %v1674, %v1674
        %v1740 = vmul.f32 %v1675, %v1675
        %v1741 = vmul.f32 %v1676, %v1676
        %v1742 = vmul.f32 %v1677, %v1677
        %v1743 = vmul.f32 %v1678, %v1678
        %v1744 = vmul.f32 %v1679, %v1679
        %v1745 = vmul.f32 %v1680, %v1680
        %v1746 = vmul.f32 %v1681, %v1681
        %v1747 = vmul.f32 %v1682, %v1682
        %v1748 = vmul.f32 %v1683, %v1683
        %v1749 = vmul.f32 %v1684, %v1684
        %v1750 = vmul.f32 %v1685, %v1685
        %v1751 = vmul.f32 %v1686, %v1686
        %v1752 = vmul.f32 %v1687, %v1687
        %v1753 = vmul.f32 %v1688, %v1688
        %v1754 = vmul.f32 %v1689, %v1689
        %v1755 = vmul.f32 %v1691, -0.5
        %v1756 = vmul.f32 %v1692, -0.5
        %v1757 = vmul.f32 %v1693, -0.5
        %v1758 = vmul.f32 %v1694, -0.5
        %v1759 = vmul.f32 %v1695, -0.5
        %v1760 = vmul.f32 %v1696, -0.5
        %v1761 = vmul.f32 %v1697, -0.5
        %v1762 = vmul.f32 %v1698, -0.5
        %v1763 = vmul.f32 %v1699, -0.5
        %v1764 = vmul.f32 %v1700, -0.5
        %v1765 = vmul.f32 %v1701, -0.5
        %v1766 = vmul.f32 %v1702, -0.5
        %v1767 = vmul.f32 %v1703, -0.5
        %v1768 = vmul.f32 %v1704, -0.5
        %v1769 = vmul.f32 %v1705, -0.5
        %v1770 = vmul.f32 %v1706, -0.5
        %v1771 = vmul.f32 %v1707, -0.5
        %v1772 = vmul.f32 %v1708, -0.5
        %v1773 = vmul.f32 %v1709, -0.5
        %v1774 = vmul.f32 %v1710, -0.5
        %v1775 = vmul.f32 %v1711, -0.5
        %v1776 = vmul.f32 %v1712, -0.5
        %v1777 = vmul.f32 %v1713, -0.5
        %v1778 = vmul.f32 %v1714, -0.5
        %v1779 = vmul.f32 %v1715, -0.5
        %v1780 = vmul.f32 %v1716, -0.5
        %v1781 = vmul.f32 %v1717, -0.5
        %v1782 = vmul.f32 %v1718, -0.5
        %v1783 = vmul.f32 %v1719, -0.5
        %v1784 = vmul.f32 %v1720, -0.5
        %v1785 = vmul.f32 %v1721, -0.5
        %v1786 = vmul.f32 %v1722, -0.5
        %v1787 = vmul.f32 %v1723, -0.5
        %v1788 = vmul.f32 %v1724, -0.5
        %v1789 = vmul.f32 %v1725, -0.5
        %v1790 = vmul.f32 %v1726, -0.5
        %v1791 = vmul.f32 %v1727, -0.5
        %v1792 = vmul.f32 %v1728, -0.5
        %v1793 = vmul.f32 %v1729, -0.5
        %v1794 = vmul.f32 %v1730, -0.5
        %v1795 = vmul.f32 %v1731, -0.5
        %v1796 = vmul.f32 %v1732, -0.5
        %v1797 = vmul.f32 %v1733, -0.5
        %v1798 = vmul.f32 %v1734, -0.5
        %v1799 = vmul.f32 %v1735, -0.5
        %v1800 = vmul.f32 %v1736, -0.5
        %v1801 = vmul.f32 %v1737, -0.5
        %v1802 = vmul.f32 %v1738, -0.5
        %v1803 = vmul.f32 %v1739, -0.5
        %v1804 = vmul.f32 %v1740, -0.5
        %v1805 = vmul.f32 %v1741, -0.5
        %v1806 = vmul.f32 %v1742, -0.5
        %v1807 = vmul.f32 %v1743, -0.5
        %v1808 = vmul.f32 %v1744, -0.5
        %v1809 = vmul.f32 %v1745, -0.5
        %v1810 = vmul.f32 %v1746, -0.5
        %v1811 = vmul.f32 %v1747, -0.5
        %v1812 = vmul.f32 %v1748, -0.5
        %v1813 = vmul.f32 %v1749, -0.5
        %v1814 = vmul.f32 %v1750, -0.5
        %v1815 = vmul.f32 %v1751, -0.5
        %v1816 = vmul.f32 %v1752, -0.5
        %v1817 = vmul.f32 %v1753, -0.5
        %v1818 = vmul.f32 %v1754, -0.5
        %v1819 = vmul.f32 %v1755, 1.442695
        %v1820 = vpow.pop %v1819
        %v1821 = vmul.f32 %v1756, 1.442695
        %v1822 = vpow.pop %v1821
        %v1823 = vmul.f32 %v1757, 1.442695
        %v1824 = vpow.pop %v1823
        %v1825 = vmul.f32 %v1758, 1.442695
        %v1826 = vpow.pop %v1825
        %v1827 = vmul.f32 %v1759, 1.442695
        %v1828 = vpow.pop %v1827
        %v1829 = vmul.f32 %v1760, 1.442695
        %v1830 = vpow.pop %v1829
        %v1831 = vmul.f32 %v1761, 1.442695
        %v1832 = vpow.pop %v1831
        %v1833 = vmul.f32 %v1762, 1.442695
        %v1834 = vpow.pop %v1833
        %v1835 = vmul.f32 %v1763, 1.442695
        %v1836 = vpow.pop %v1835
        %v1837 = vmul.f32 %v1764, 1.442695
        %v1838 = vpow.pop %v1837
        %v1839 = vmul.f32 %v1765, 1.442695
        %v1840 = vpow.pop %v1839
        %v1841 = vmul.f32 %v1766, 1.442695
        %v1842 = vpow.pop %v1841
        %v1843 = vmul.f32 %v1767, 1.442695
        %v1844 = vpow.pop %v1843
        %v1845 = vmul.f32 %v1768, 1.442695
        %v1846 = vpow.pop %v1845
        %v1847 = vmul.f32 %v1769, 1.442695
        %v1848 = vpow.pop %v1847
        %v1849 = vmul.f32 %v1770, 1.442695
        %v1850 = vpow.pop %v1849
        %v1851 = vmul.f32 %v1771, 1.442695
        %v1852 = vpow.pop %v1851
        %v1853 = vmul.f32 %v1772, 1.442695
        %v1854 = vpow.pop %v1853
        %v1855 = vmul.f32 %v1773, 1.442695
        %v1856 = vpow.pop %v1855
        %v1857 = vmul.f32 %v1774, 1.442695
        %v1858 = vpow.pop %v1857
        %v1859 = vmul.f32 %v1775, 1.442695
        %v1860 = vpow.pop %v1859
        %v1861 = vmul.f32 %v1776, 1.442695
        %v1862 = vpow.pop %v1861
        %v1863 = vmul.f32 %v1777, 1.442695
        %v1864 = vpow.pop %v1863
        %v1865 = vmul.f32 %v1778, 1.442695
        %v1866 = vpow.pop %v1865
        %v1867 = vmul.f32 %v1779, 1.442695
        %v1868 = vpow.pop %v1867
        %v1869 = vmul.f32 %v1780, 1.442695
        %v1870 = vpow.pop %v1869
        %v1871 = vmul.f32 %v1781, 1.442695
        %v1872 = vpow.pop %v1871
        %v1873 = vmul.f32 %v1782, 1.442695
        %v1874 = vpow.pop %v1873
        %v1875 = vmul.f32 %v1783, 1.442695
        %v1876 = vpow.pop %v1875
        %v1877 = vmul.f32 %v1784, 1.442695
        %v1878 = vpow.pop %v1877
        %v1879 = vmul.f32 %v1785, 1.442695
        %v1880 = vpow.pop %v1879
        %v1881 = vmul.f32 %v1786, 1.442695
        %v1882 = vpow.pop %v1881
        %v1883 = vmul.f32 %v1787, 1.442695
        %v1884 = vpow.pop %v1883
        %v1885 = vmul.f32 %v1788, 1.442695
        %v1886 = vpow.pop %v1885
        %v1887 = vmul.f32 %v1789, 1.442695
        %v1888 = vpow.pop %v1887
        %v1889 = vmul.f32 %v1790, 1.442695
        %v1890 = vpow.pop %v1889
        %v1891 = vmul.f32 %v1791, 1.442695
        %v1892 = vpow.pop %v1891
        %v1893 = vmul.f32 %v1792, 1.442695
        %v1894 = vpow.pop %v1893
        %v1895 = vmul.f32 %v1793, 1.442695
        %v1896 = vpow.pop %v1895
        %v1897 = vmul.f32 %v1794, 1.442695
        %v1898 = vpow.pop %v1897
        %v1899 = vmul.f32 %v1795, 1.442695
        %v1900 = vpow.pop %v1899
        %v1901 = vmul.f32 %v1796, 1.442695
        %v1902 = vpow.pop %v1901
        %v1903 = vmul.f32 %v1797, 1.442695
        %v1904 = vpow.pop %v1903
        %v1905 = vmul.f32 %v1798, 1.442695
        %v1906 = vpow.pop %v1905
        %v1907 = vmul.f32 %v1799, 1.442695
        %v1908 = vpow.pop %v1907
        %v1909 = vmul.f32 %v1800, 1.442695
        %v1910 = vpow.pop %v1909
        %v1911 = vmul.f32 %v1801, 1.442695
        %v1912 = vpow.pop %v1911
        %v1913 = vmul.f32 %v1802, 1.442695
        %v1914 = vpow.pop %v1913
        %v1915 = vmul.f32 %v1803, 1.442695
        %v1916 = vpow.pop %v1915
        %v1917 = vmul.f32 %v1804, 1.442695
        %v1918 = vpow.pop %v1917
        %v1919 = vmul.f32 %v1805, 1.442695
        %v1920 = vpow.pop %v1919
        %v1921 = vmul.f32 %v1806, 1.442695
        %v1922 = vpow.pop %v1921
        %v1923 = vmul.f32 %v1807, 1.442695
        %v1924 = vpow.pop %v1923
        %v1925 = vmul.f32 %v1808, 1.442695
        %v1926 = vpow.pop %v1925
        %v1927 = vmul.f32 %v1809, 1.442695
        %v1928 = vpow.pop %v1927
        %v1929 = vmul.f32 %v1810, 1.442695
        %v1930 = vpow.pop %v1929
        %v1931 = vmul.f32 %v1811, 1.442695
        %v1932 = vpow.pop %v1931
        %v1933 = vmul.f32 %v1812, 1.442695
        %v1934 = vpow.pop %v1933
        %v1935 = vmul.f32 %v1813, 1.442695
        %v1936 = vpow.pop %v1935
        %v1937 = vmul.f32 %v1814, 1.442695
        %v1938 = vpow.pop %v1937
        %v1939 = vmul.f32 %v1815, 1.442695
        %v1940 = vpow.pop %v1939
        %v1941 = vmul.f32 %v1816, 1.442695
        %v1942 = vpow.pop %v1941
        %v1943 = vmul.f32 %v1817, 1.442695
        %v1944 = vpow.pop %v1943
        %v1945 = vmul.f32 %v1818, 1.442695
        %v1946 = vpow.pop %v1945
        %v1948 = vlaneseq
        %v1949 = vshrl.u32 %v1948, 7
        %v1950 = vsub.s32 0, %v1949
        %v1951 = vrot.slane %v1690, %v1950
        %v1953 = vmul.f32 %v1951, %v1820
        %v1954 = vmul.f32 %v1951, %v1822
        %v1955 = vmul.f32 %v1951, %v1824
        %v1956 = vmul.f32 %v1951, %v1826
        %v1957 = vmul.f32 %v1951, %v1828
        %v1958 = vmul.f32 %v1951, %v1830
        %v1959 = vmul.f32 %v1951, %v1832
        %v1960 = vmul.f32 %v1951, %v1834
        %v1961 = vmul.f32 %v1951, %v1836
        %v1962 = vmul.f32 %v1951, %v1838
        %v1963 = vmul.f32 %v1951, %v1840
        %v1964 = vmul.f32 %v1951, %v1842
        %v1965 = vmul.f32 %v1951, %v1844
        %v1966 = vmul.f32 %v1951, %v1846
        %v1967 = vmul.f32 %v1951, %v1848
        %v1968 = vmul.f32 %v1951, %v1850
        %v1969 = vmul.f32 %v1951, %v1852
        %v1970 = vmul.f32 %v1951, %v1854
        %v1971 = vmul.f32 %v1951, %v1856
        %v1972 = vmul.f32 %v1951, %v1858
        %v1973 = vmul.f32 %v1951, %v1860
        %v1974 = vmul.f32 %v1951, %v1862
        %v1975 = vmul.f32 %v1951, %v1864
        %v1976 = vmul.f32 %v1951, %v1866
        %v1977 = vmul.f32 %v1951, %v1868
        %v1978 = vmul.f32 %v1951, %v1870
        %v1979 = vmul.f32 %v1951, %v1872
        %v1980 = vmul.f32 %v1951, %v1874
        %v1981 = vmul.f32 %v1951, %v1876
        %v1982 = vmul.f32 %v1951, %v1878
        %v1983 = vmul.f32 %v1951, %v1880
        %v1984 = vmul.f32 %v1951, %v1882
        %v1985 = vmul.f32 %v1951, %v1884
        %v1986 = vmul.f32 %v1951, %v1886
        %v1987 = vmul.f32 %v1951, %v1888
        %v1988 = vmul.f32 %v1951, %v1890
        %v1989 = vmul.f32 %v1951, %v1892
        %v1990 = vmul.f32 %v1951, %v1894
        %v1991 = vmul.f32 %v1951, %v1896
        %v1992 = vmul.f32 %v1951, %v1898
        %v1993 = vmul.f32 %v1951, %v1900
        %v1994 = vmul.f32 %v1951, %v1902
        %v1995 = vmul.f32 %v1951, %v1904
        %v1996 = vmul.f32 %v1951, %v1906
        %v1997 = vmul.f32 %v1951, %v1908
        %v1998 = vmul.f32 %v1951, %v1910
        %v1999 = vmul.f32 %v1951, %v1912
        %v2000 = vmul.f32 %v1951, %v1914
        %v2001 = vmul.f32 %v1951, %v1916
        %v2002 = vmul.f32 %v1951, %v1918
        %v2003 = vmul.f32 %v1951, %v1920
        %v2004 = vmul.f32 %v1951, %v1922
        %v2005 = vmul.f32 %v1951, %v1924
        %v2006 = vmul.f32 %v1951, %v1926
        %v2007 = vmul.f32 %v1951, %v1928
        %v2008 = vmul.f32 %v1951, %v1930
        %v2009 = vmul.f32 %v1951, %v1932
        %v2010 = vmul.f32 %v1951, %v1934
        %v2011 = vmul.f32 %v1951, %v1936
        %v2012 = vmul.f32 %v1951, %v1938
        %v2013 = vmul.f32 %v1951, %v1940
        %v2014 = vmul.f32 %v1951, %v1942
        %v2015 = vmul.f32 %v1951, %v1944
        %v2016 = vmul.f32 %v1951, %v1946
        %2017 = vst [vmem:[%s191] sm:$0xff] %v1953
        %2018 = vst [vmem:[%s191 + $0x8] sm:$0xff] %v1954
        %2019 = vst [vmem:[%s191 + $0x10] sm:$0xff] %v1955
        %2020 = vst [vmem:[%s191 + $0x18] sm:$0xff] %v1956
        %2021 = vst [vmem:[%s191 + $0x20] sm:$0xff] %v1957
        %2022 = vst [vmem:[%s191 + $0x28] sm:$0xff] %v1958
        %2023 = vst [vmem:[%s191 + $0x30] sm:$0xff] %v1959
        %2024 = vst [vmem:[%s191 + $0x38] sm:$0xff] %v1960
        %2025 = vst [vmem:[%s191 + $0x40] sm:$0xff] %v1961
        %2026 = vst [vmem:[%s191 + $0x48] sm:$0xff] %v1962
        %2027 = vst [vmem:[%s191 + $0x50] sm:$0xff] %v1963
        %2028 = vst [vmem:[%s191 + $0x58] sm:$0xff] %v1964
        %2029 = vst [vmem:[%s191 + $0x60] sm:$0xff] %v1965
        %2030 = vst [vmem:[%s191 + $0x68] sm:$0xff] %v1966
        %2031 = vst [vmem:[%s191 + $0x70] sm:$0xff] %v1967
        %2032 = vst [vmem:[%s191 + $0x78] sm:$0xff] %v1968
        %2033 = vst [vmem:[%s191 + $0x80] sm:$0xff] %v1969
        %2034 = vst [vmem:[%s191 + $0x88] sm:$0xff] %v1970
        %2035 = vst [vmem:[%s191 + $0x90] sm:$0xff] %v1971
        %2036 = vst [vmem:[%s191 + $0x98] sm:$0xff] %v1972
        %2037 = vst [vmem:[%s191 + $0xa0] sm:$0xff] %v1973
        %2038 = vst [vmem:[%s191 + $0xa8] sm:$0xff] %v1974
        %2039 = vst [vmem:[%s191 + $0xb0] sm:$0xff] %v1975
        %2040 = vst [vmem:[%s191 + $0xb8] sm:$0xff] %v1976
        %2041 = vst [vmem:[%s191 + $0xc0] sm:$0xff] %v1977
        %2042 = vst [vmem:[%s191 + $0xc8] sm:$0xff] %v1978
        %2043 = vst [vmem:[%s191 + $0xd0] sm:$0xff] %v1979
        %2044 = vst [vmem:[%s191 + $0xd8] sm:$0xff] %v1980
        %2045 = vst [vmem:[%s191 + $0xe0] sm:$0xff] %v1981
        %2046 = vst [vmem:[%s191 + $0xe8] sm:$0xff] %v1982
        %2047 = vst [vmem:[%s191 + $0xf0] sm:$0xff] %v1983
        %2048 = vst [vmem:[%s191 + $0xf8] sm:$0xff] %v1984
        %2049 = vst [vmem:[%s191 + $0x100] sm:$0xff] %v1985
        %2050 = vst [vmem:[%s191 + $0x108] sm:$0xff] %v1986
        %2051 = vst [vmem:[%s191 + $0x110] sm:$0xff] %v1987
        %2052 = vst [vmem:[%s191 + $0x118] sm:$0xff] %v1988
        %2053 = vst [vmem:[%s191 + $0x120] sm:$0xff] %v1989
        %2054 = vst [vmem:[%s191 + $0x128] sm:$0xff] %v1990
        %2055 = vst [vmem:[%s191 + $0x130] sm:$0xff] %v1991
        %2056 = vst [vmem:[%s191 + $0x138] sm:$0xff] %v1992
        %2057 = vst [vmem:[%s191 + $0x140] sm:$0xff] %v1993
        %2058 = vst [vmem:[%s191 + $0x148] sm:$0xff] %v1994
        %2059 = vst [vmem:[%s191 + $0x150] sm:$0xff] %v1995
        %2060 = vst [vmem:[%s191 + $0x158] sm:$0xff] %v1996
        %2061 = vst [vmem:[%s191 + $0x160] sm:$0xff] %v1997
        %2062 = vst [vmem:[%s191 + $0x168] sm:$0xff] %v1998
        %2063 = vst [vmem:[%s191 + $0x170] sm:$0xff] %v1999
        %2064 = vst [vmem:[%s191 + $0x178] sm:$0xff] %v2000
        %2065 = vst [vmem:[%s191 + $0x180] sm:$0xff] %v2001
        %2066 = vst [vmem:[%s191 + $0x188] sm:$0xff] %v2002
        %2067 = vst [vmem:[%s191 + $0x190] sm:$0xff] %v2003
        %2068 = vst [vmem:[%s191 + $0x198] sm:$0xff] %v2004
        %2069 = vst [vmem:[%s191 + $0x1a0] sm:$0xff] %v2005
        %2070 = vst [vmem:[%s191 + $0x1a8] sm:$0xff] %v2006
        %2071 = vst [vmem:[%s191 + $0x1b0] sm:$0xff] %v2007
        %2072 = vst [vmem:[%s191 + $0x1b8] sm:$0xff] %v2008
        %2073 = vst [vmem:[%s191 + $0x1c0] sm:$0xff] %v2009
        %2074 = vst [vmem:[%s191 + $0x1c8] sm:$0xff] %v2010
        %2075 = vst [vmem:[%s191 + $0x1d0] sm:$0xff] %v2011
        %2076 = vst [vmem:[%s191 + $0x1d8] sm:$0xff] %v2012
        %2077 = vst [vmem:[%s191 + $0x1e0] sm:$0xff] %v2013
        %2078 = vst [vmem:[%s191 + $0x1e8] sm:$0xff] %v2014
        %2079 = vst [vmem:[%s191 + $0x1f0] sm:$0xff] %v2015
        %2080 = vst [vmem:[%s191 + $0x1f8] sm:$0xff] %v2016
        %s2081 = sand.u32 %s115, 1
        %s2082 = scalar_lea.sflag [#allocation3], %s2081
        %s2083 = sand.u32 %s115, 1
        %s2084 = smul.addr %s2083, 512
        %s2085 = scalar_lea.vmem [#allocation2], %s2084
        // Predicated region
        $region37: #{tpu_custom_call.1} parent=35 // pred_check
          %p2086 = pneg %p125
        $region38: #{tpu_custom_call.1} parent=35 // pred_check_branch
          %2088 = sbr.rel (%p2086) target = $region40
        $region39: #{tpu_custom_call.1} parent=35 // pred_region
          %s2089 = smul.u32 64, %s18
          %s2091 = ssub.s32 8192, 8192
          %2092 = vsyncadd %s2082, %s2091
          %s2093 = smul.addr %s2089, 128
          %s2094 = scalar_lea.hbm %s4, %s2093
          %s2095 = sshll.u32 %s2085, 4
          %s2096 = int_to_ptr.vmem [resolvable:$true] %s2095
          %2101 = dma.vmem_to_hbm [thread:$0]  %s2096, 8192, %s2094, %s2082, 128, 128, 8
        $region40: #{tpu_custom_call.1} parent=35 // pred_fallthru
          _
      $region36: #{tpu_custom_call.1} parent=5 // pred_fallthru
        _
      %p2102 = scmp.le.s32.totalorder 2, %s13
      // Predicated region
      $region41: #{tpu_custom_call.1} parent=5 // pred_check
        %p2103 = pneg %p2102
      $region42: #{tpu_custom_call.1} parent=5 // pred_check_branch
        %2105 = sbr.rel (%p2103) target = $region44
      $region43: #{tpu_custom_call.1} parent=5 // pred_region
        %s2106 = ssub.s32 %s13, 2
        // Predicated region
        $region45: #{tpu_custom_call.1} parent=43 // pred_check
          %p2107 = pneg %p131
        $region46: #{tpu_custom_call.1} parent=43 // pred_check_branch
          %2109 = sbr.rel (%p2107) target = $region48
        $region47: #{tpu_custom_call.1} parent=43 // pred_region
          %s2110 = sand.u32 %s116, 1
          %s2111 = scalar_lea.sflag [#allocation3], %s2110
          %s2112 = sand.u32 %s116, 1
          %s2113 = smul.addr %s2112, 512
          %s2114 = scalar_lea.vmem [#allocation2], %s2113
          %2115 = dma.done %s2111, 8192
        $region48: #{tpu_custom_call.1} parent=43 // pred_fallthru
          _
      $region44: #{tpu_custom_call.1} parent=5 // pred_fallthru
        _
    $region6: #{tpu_custom_call.1} parent=1 // loop_footer
      %s17 = sadd.s32 1, %s13
    $region7: #{tpu_custom_call.1} parent=1 // loop_footer_branch
      %12 = sbr.rel target = $region3
    $region8: #{tpu_custom_call.1} parent=1 // loop_exit
      _
    %2116 = vsyncpa [#allocation3], 1
    %s2117 = scalar_lea.sflag [#allocation3], 1
    %2118 = vsyncpa %s2117, 1

</llo_original>
